<compile_context>
chip_gen: v6e
topology: v6e:2x2x1
jax: 0.10.0
libtpu: 0.0.40
codegen_flags: <defaults>
</compile_context>

<pallas_src>
import jax
import jax.numpy as jnp
from jax import lax
from jax.experimental import pallas as pl
from jax.experimental.pallas import tpu as pltpu


def _round_up(x, m):
    return ((x + m - 1) // m) * m


def _largest_divisor_le(n, cap):
    for d in range(min(n, cap), 0, -1):
        if n % d == 0:
            return d
    return 1


def _pick_p_tile(p_pad):
    for cand in (512, 256, 128):
        if p_pad % cand == 0:
            return cand
    return 128


# ----------------------- kernel 1: GRU recurrence over T-chunks -----------------------
def gru_chunk_kernel(emb_ref, wih_ref, whh_ref, bx_ref, bhn_ref, h_ref):
    Tt, Bp, E = emb_ref.shape
    H = whh_ref.shape[0]

    @pl.when(pl.program_id(0) == 0)
    def _():
        h_ref[...] = jnp.zeros_like(h_ref)

    # Hoisted input-path GEMM for the whole chunk: one matmul with M = Tt*Bp.
    # (Bp is a multiple of 8, so collapsing the leading dims is a layout no-op.)
    x2d = emb_ref[...].reshape(Tt * Bp, E)
    gx_all = (jnp.dot(x2d, wih_ref[...], preferred_element_type=jnp.float32)
              + bx_ref[...])                                   # (Tt*Bp, 3H)

    whh = whh_ref[...]          # (H, 3H)
    bhn = bhn_ref[...]          # (1, H)

    h = h_ref[...]              # carry from previous chunk (resident output block)
    for t in range(Tt):         # static -> fully unrolled recurrence
        gx = gx_all[t * Bp:(t + 1) * Bp, :]                              # (Bp, 3H)
        gh = jnp.dot(h, whh, preferred_element_type=jnp.float32)         # (Bp, 3H)
        r = jax.nn.sigmoid(gx[:, 0:H] + gh[:, 0:H])
        z = jax.nn.sigmoid(gx[:, H:2 * H] + gh[:, H:2 * H])
        n = jnp.tanh(gx[:, 2 * H:3 * H] + r * (gh[:, 2 * H:3 * H] + bhn))
        h = (1.0 - z) * n + z * h
    h_ref[...] = h


# ----------------------- kernel 2: final FC, tiled over products ----------------------
def fc_kernel(h_ref, wfc_ref, bfc_ref, out_ref):
    out_ref[...] = (jnp.dot(h_ref[...], wfc_ref[...],
                            preferred_element_type=jnp.float32) + bfc_ref[...])


def sequential_recommender_forward(x_ids, params, *, t_chunk=8, p_tile=None):
    """x_ids: (B, T) int32 product indices. Returns logits (B, num_products)."""
    emb_table, w_ih, w_hh, b_ih, b_hh, w_fc, b_fc = params
    B, T = x_ids.shape
    E = emb_table.shape[1]
    H = w_hh.shape[1]          # torch layout: w_hh is (3H, H)
    P = w_fc.shape[0]          # torch layout: w_fc is (P, H)
    assert H % 128 == 0, "hidden size must be a multiple of 128 (lane-aligned gates)"

    Bp = max(8, _round_up(B, 8))            # sublane-aligned batch
    Tt = _largest_divisor_le(T, t_chunk)    # static chunk length dividing T
    P_pad = _round_up(P, 128)               # lane-dense output
    if p_tile is None:
        p_tile = _pick_p_tile(P_pad)
    assert P_pad % p_tile == 0

    # Embedding gather directly in time-major order: (T, B, E); pad batch rows with zeros.
    emb_tm = jnp.take(emb_table, x_ids.T, axis=0)
    if Bp != B:
        emb_tm = jnp.pad(emb_tm, ((0, 0), (0, Bp - B), (0, 0)))

    # Weight / bias prep (torch layouts -> MXU-friendly transposes).
    wih_t = w_ih.T                                         # (E, 3H), gate order [r, z, n]
    whh_t = w_hh.T                                         # (H, 3H)
    bx = (b_ih + jnp.concatenate(
        [b_hh[:2 * H], jnp.zeros((H,), b_hh.dtype)])).reshape(1, 3 * H)   # folded biases
    bhn = b_hh[2 * H:3 * H].reshape(1, H)                  # stays inside the r*(...) term

    wfc_t = w_fc.T                                         # (H, P)
    bfc2 = b_fc.reshape(1, P)
    if P_pad != P:
        wfc_t = jnp.pad(wfc_t, ((0, 0), (0, P_pad - P)))
        bfc2 = jnp.pad(bfc2, ((0, 0), (0, P_pad - P)))

    # --- GRU recurrence: emb streamed over T-chunks, h resident across the grid ---
    h_final = pl.pallas_call(
        gru_chunk_kernel,
        out_shape=jax.ShapeDtypeStruct((Bp, H), jnp.float32),
        grid_spec=pltpu.PrefetchScalarGridSpec(
            num_scalar_prefetch=0,
            grid=(T // Tt,),
            in_specs=[
                pl.BlockSpec((Tt, Bp, E), lambda t: (t, 0, 0)),   # streamed chunk
                pl.BlockSpec((E, 3 * H), lambda t: (0, 0)),
                pl.BlockSpec((H, 3 * H), lambda t: (0, 0)),
                pl.BlockSpec((1, 3 * H), lambda t: (0, 0)),
                pl.BlockSpec((1, H), lambda t: (0, 0)),
            ],
            out_specs=pl.BlockSpec((Bp, H), lambda t: (0, 0)),    # resident accumulator
        ),
        compiler_params=pltpu.CompilerParams(
            dimension_semantics=("arbitrary",)),
    )(emb_tm, wih_t, whh_t, bx, bhn)

    # --- Final FC tiled over P (parallel axis; lane-dense output tiles) ---
    logits = pl.pallas_call(
        fc_kernel,
        out_shape=jax.ShapeDtypeStruct((Bp, P_pad), jnp.float32),
        grid_spec=pltpu.PrefetchScalarGridSpec(
            num_scalar_prefetch=0,
            grid=(P_pad // p_tile,),
            in_specs=[
                pl.BlockSpec((Bp, H), lambda j: (0, 0)),
                pl.BlockSpec((H, p_tile), lambda j: (0, j)),
                pl.BlockSpec((1, p_tile), lambda j: (0, j)),
            ],
            out_specs=pl.BlockSpec((Bp, p_tile), lambda j: (0, j)),
        ),
        compiler_params=pltpu.CompilerParams(
            dimension_semantics=("parallel",)),
    )(h_final, wfc_t, bfc2)

    return logits[:B, :P]


def reference_forward(x_ids, params):
    """Pure-JAX reference matching torch.nn.GRU semantics (gate order r,z,n)."""
    emb_table, w_ih, w_hh, b_ih, b_hh, w_fc, b_fc = params
    H = w_hh.shape[1]
    emb = jnp.take(emb_table, x_ids, axis=0)            # (B, T, E)
    B, T, E = emb.shape

    def step(h, x_t):
        gx = x_t @ w_ih.T + b_ih
        gh = h @ w_hh.T + b_hh
        r = jax.nn.sigmoid(gx[:, 0:H] + gh[:, 0:H])
        z = jax.nn.sigmoid(gx[:, H:2 * H] + gh[:, H:2 * H])
        n = jnp.tanh(gx[:, 2 * H:3 * H] + r * gh[:, 2 * H:3 * H])
        h_new = (1.0 - z) * n + z * h
        return h_new, None

    h0 = jnp.zeros((B, H), jnp.float32)
    h_final, _ = lax.scan(step, h0, jnp.transpose(emb, (1, 0, 2)))
    return h_final @ w_fc.T + b_fc


if __name__ == "__main__":
    num_products = 256
    embedding_dim = 64
    hidden = 128
    B, T = 4, 8

    key = jax.random.PRNGKey(0)
    ks = jax.random.split(key, 8)
    emb_table = jax.random.normal(ks[0], (num_products, embedding_dim), jnp.float32) * 0.1
    w_ih = jax.random.normal(ks[1], (3 * hidden, embedding_dim), jnp.float32) * 0.1
    w_hh = jax.random.normal(ks[2], (3 * hidden, hidden), jnp.float32) * 0.1
    b_ih = jax.random.normal(ks[3], (3 * hidden,), jnp.float32) * 0.1
    b_hh = jax.random.normal(ks[4], (3 * hidden,), jnp.float32) * 0.1
    w_fc = jax.random.normal(ks[5], (num_products, hidden), jnp.float32) * 0.1
    b_fc = jax.random.normal(ks[6], (num_products,), jnp.float32) * 0.1
    params = (emb_table, w_ih, w_hh, b_ih, b_hh, w_fc, b_fc)

    x_ids = jax.random.randint(ks[7], (B, T), 0, num_products, jnp.int32)

    # t_chunk=4 -> two grid steps, exercising the resident-h carry across chunks.
    out = sequential_recommender_forward(x_ids, params, t_chunk=4)
    out = jax.block_until_ready(out)

    ref = jax.block_until_ready(reference_forward(x_ids, params))
    assert out.shape == (B, num_products)
    assert jnp.allclose(out, ref, atol=2e-4, rtol=2e-4), "mismatch vs pure-JAX reference"

    print("KERNEL_OK")
</pallas_src>

<mosaic_0001>
module attributes {stable_mosaic.version = 11 : i64} {
  func.func @gru_chunk_kernel(%arg0: i32, %arg1: memref<4x8x64xf32, #tpu.memory_space<vmem>>, %arg2: memref<64x384xf32, #tpu.memory_space<vmem>>, %arg3: memref<128x384xf32, #tpu.memory_space<vmem>>, %arg4: memref<1x384xf32, #tpu.memory_space<vmem>>, %arg5: memref<1x128xf32, #tpu.memory_space<vmem>>, %arg6: memref<8x128xf32, #tpu.memory_space<vmem>>) attributes {dimension_semantics = [#tpu.dimension_semantics<arbitrary>], iteration_bounds = array<i64: 2>, scalar_prefetch = 0 : i64, scratch_operands = 0 : i64, tpu.core_type = #tpu.core_type<tc>, window_params = [{transform_indices = @transform_0, window_bounds = array<i64: 4, 8, 64>}, {pipeline_mode = #tpu.pipeline_mode<synchronous>, transform_indices = @transform_1, window_bounds = array<i64: 64, 384>}, {pipeline_mode = #tpu.pipeline_mode<synchronous>, transform_indices = @transform_2, window_bounds = array<i64: 128, 384>}, {pipeline_mode = #tpu.pipeline_mode<synchronous>, transform_indices = @transform_3, window_bounds = array<i64: 1, 384>}, {pipeline_mode = #tpu.pipeline_mode<synchronous>, transform_indices = @transform_4, window_bounds = array<i64: 1, 128>}, {pipeline_mode = #tpu.pipeline_mode<synchronous>, transform_indices = @transform_5, window_bounds = array<i64: 8, 128>}]} {
    %c0_i32 = arith.constant 0 : i32
    %0 = arith.cmpi eq, %arg0, %c0_i32 : i32
    %1 = arith.extui %0 : i1 to i32
    %c0_i32_0 = arith.constant 0 : i32
    %2 = arith.cmpi ne, %1, %c0_i32_0 : i32
    scf.if %2 {
      %cst_31 = arith.constant 0.000000e+00 : f32
      %134 = vector.broadcast %cst_31 : f32 to vector<8x128xf32>
      %c0_32 = arith.constant 0 : index
      %c0_33 = arith.constant 0 : index
      %135 = vector.load %arg6[%c0_32, %c0_33] : memref<8x128xf32, #tpu.memory_space<vmem>>, vector<8x128xf32>
      tpu.vector_store %arg6[%c0_32, %c0_33], %134 {strides = array<i32>} : memref<8x128xf32, #tpu.memory_space<vmem>>, vector<8x128xf32>,
    } else {
    }
    %c0 = arith.constant 0 : index
    %c0_1 = arith.constant 0 : index
    %c0_2 = arith.constant 0 : index
    %3 = vector.load %arg1[%c0, %c0_1, %c0_2] : memref<4x8x64xf32, #tpu.memory_space<vmem>>, vector<4x8x64xf32>
    %4 = vector.shape_cast %3 : vector<4x8x64xf32> to vector<32x64xf32>
    %c0_3 = arith.constant 0 : index
    %c0_4 = arith.constant 0 : index
    %5 = vector.load %arg2[%c0_3, %c0_4] : memref<64x384xf32, #tpu.memory_space<vmem>>, vector<64x384xf32>
    %cst = arith.constant dense<0.000000e+00> : vector<32x384xf32>
    %6 = tpu.matmul %4, %5, %cst {dimension_numbers = #tpu.dot_dimension_numbers<[1], [0], [0], [1], [0, 0, 1, 1], [], []>} : vector<32x64xf32>, vector<64x384xf32>, vector<32x384xf32> -> vector<32x384xf32>
    %c0_5 = arith.constant 0 : index
    %c0_6 = arith.constant 0 : index
    %7 = vector.load %arg4[%c0_5, %c0_6] : memref<1x384xf32, #tpu.memory_space<vmem>>, vector<1x384xf32>
    %8 = vector.broadcast %7 : vector<1x384xf32> to vector<32x384xf32>
    %9 = arith.addf %6, %8 : vector<32x384xf32>
    %c0_7 = arith.constant 0 : index
    %c0_8 = arith.constant 0 : index
    %10 = vector.load %arg3[%c0_7, %c0_8] : memref<128x384xf32, #tpu.memory_space<vmem>>, vector<128x384xf32>
    %c0_9 = arith.constant 0 : index
    %c0_10 = arith.constant 0 : index
    %11 = vector.load %arg5[%c0_9, %c0_10] : memref<1x128xf32, #tpu.memory_space<vmem>>, vector<1x128xf32>
    %c0_11 = arith.constant 0 : index
    %c0_12 = arith.constant 0 : index
    %12 = vector.load %arg6[%c0_11, %c0_12] : memref<8x128xf32, #tpu.memory_space<vmem>>, vector<8x128xf32>
    %13 = vector.extract_strided_slice %9 {offsets = [0, 0], sizes = [8, 384], strides = [1, 1]} : vector<32x384xf32> to vector<8x384xf32>
    %cst_13 = arith.constant dense<0.000000e+00> : vector<8x384xf32>
    %14 = tpu.matmul %12, %10, %cst_13 {dimension_numbers = #tpu.dot_dimension_numbers<[1], [0], [0], [1], [0, 0, 1, 1], [], []>} : vector<8x128xf32>, vector<128x384xf32>, vector<8x384xf32> -> vector<8x384xf32>
    %15 = vector.extract_strided_slice %13 {offsets = [0, 0], sizes = [8, 128], strides = [1, 1]} : vector<8x384xf32> to vector<8x128xf32>
    %16 = vector.extract_strided_slice %14 {offsets = [0, 0], sizes = [8, 128], strides = [1, 1]} : vector<8x384xf32> to vector<8x128xf32>
    %17 = arith.addf %15, %16 : vector<8x128xf32>
    %18 = arith.negf %17 : vector<8x128xf32>
    %19 = math.exp %18 : vector<8x128xf32>
    %cst_14 = arith.constant 1.000000e+00 : f32
    %20 = vector.broadcast %cst_14 : f32 to vector<8x128xf32>
    %21 = arith.addf %20, %19 : vector<8x128xf32>
    %22 = arith.divf %20, %21 : vector<8x128xf32>
    %23 = vector.extract_strided_slice %13 {offsets = [0, 128], sizes = [8, 128], strides = [1, 1]} : vector<8x384xf32> to vector<8x128xf32>
    %24 = vector.extract_strided_slice %14 {offsets = [0, 128], sizes = [8, 128], strides = [1, 1]} : vector<8x384xf32> to vector<8x128xf32>
    %25 = arith.addf %23, %24 : vector<8x128xf32>
    %26 = arith.negf %25 : vector<8x128xf32>
    %27 = math.exp %26 : vector<8x128xf32>
    %cst_15 = arith.constant 1.000000e+00 : f32
    %28 = vector.broadcast %cst_15 : f32 to vector<8x128xf32>
    %29 = arith.addf %28, %27 : vector<8x128xf32>
    %30 = arith.divf %28, %29 : vector<8x128xf32>
    %31 = vector.extract_strided_slice %13 {offsets = [0, 256], sizes = [8, 128], strides = [1, 1]} : vector<8x384xf32> to vector<8x128xf32>
    %32 = vector.extract_strided_slice %14 {offsets = [0, 256], sizes = [8, 128], strides = [1, 1]} : vector<8x384xf32> to vector<8x128xf32>
    %33 = vector.broadcast %11 : vector<1x128xf32> to vector<8x128xf32>
    %34 = arith.addf %32, %33 : vector<8x128xf32>
    %35 = arith.mulf %22, %34 : vector<8x128xf32>
    %36 = arith.addf %31, %35 : vector<8x128xf32>
    %37 = math.tanh %36 : vector<8x128xf32>
    %cst_16 = arith.constant 1.000000e+00 : f32
    %38 = vector.broadcast %cst_16 : f32 to vector<8x128xf32>
    %39 = arith.subf %38, %30 : vector<8x128xf32>
    %40 = arith.mulf %39, %37 : vector<8x128xf32>
    %41 = arith.mulf %30, %12 : vector<8x128xf32>
    %42 = arith.addf %40, %41 : vector<8x128xf32>
    %43 = vector.extract_strided_slice %9 {offsets = [8, 0], sizes = [8, 384], strides = [1, 1]} : vector<32x384xf32> to vector<8x384xf32>
    %cst_17 = arith.constant dense<0.000000e+00> : vector<8x384xf32>
    %44 = tpu.matmul %42, %10, %cst_17 {dimension_numbers = #tpu.dot_dimension_numbers<[1], [0], [0], [1], [0, 0, 1, 1], [], []>} : vector<8x128xf32>, vector<128x384xf32>, vector<8x384xf32> -> vector<8x384xf32>
    %45 = vector.extract_strided_slice %43 {offsets = [0, 0], sizes = [8, 128], strides = [1, 1]} : vector<8x384xf32> to vector<8x128xf32>
    %46 = vector.extract_strided_slice %44 {offsets = [0, 0], sizes = [8, 128], strides = [1, 1]} : vector<8x384xf32> to vector<8x128xf32>
    %47 = arith.addf %45, %46 : vector<8x128xf32>
    %48 = arith.negf %47 : vector<8x128xf32>
    %49 = math.exp %48 : vector<8x128xf32>
    %cst_18 = arith.constant 1.000000e+00 : f32
    %50 = vector.broadcast %cst_18 : f32 to vector<8x128xf32>
    %51 = arith.addf %50, %49 : vector<8x128xf32>
    %52 = arith.divf %50, %51 : vector<8x128xf32>
    %53 = vector.extract_strided_slice %43 {offsets = [0, 128], sizes = [8, 128], strides = [1, 1]} : vector<8x384xf32> to vector<8x128xf32>
    %54 = vector.extract_strided_slice %44 {offsets = [0, 128], sizes = [8, 128], strides = [1, 1]} : vector<8x384xf32> to vector<8x128xf32>
    %55 = arith.addf %53, %54 : vector<8x128xf32>
    %56 = arith.negf %55 : vector<8x128xf32>
    %57 = math.exp %56 : vector<8x128xf32>
    %cst_19 = arith.constant 1.000000e+00 : f32
    %58 = vector.broadcast %cst_19 : f32 to vector<8x128xf32>
    %59 = arith.addf %58, %57 : vector<8x128xf32>
    %60 = arith.divf %58, %59 : vector<8x128xf32>
    %61 = vector.extract_strided_slice %43 {offsets = [0, 256], sizes = [8, 128], strides = [1, 1]} : vector<8x384xf32> to vector<8x128xf32>
    %62 = vector.extract_strided_slice %44 {offsets = [0, 256], sizes = [8, 128], strides = [1, 1]} : vector<8x384xf32> to vector<8x128xf32>
    %63 = vector.broadcast %11 : vector<1x128xf32> to vector<8x128xf32>
    %64 = arith.addf %62, %63 : vector<8x128xf32>
    %65 = arith.mulf %52, %64 : vector<8x128xf32>
    %66 = arith.addf %61, %65 : vector<8x128xf32>
    %67 = math.tanh %66 : vector<8x128xf32>
    %cst_20 = arith.constant 1.000000e+00 : f32
    %68 = vector.broadcast %cst_20 : f32 to vector<8x128xf32>
    %69 = arith.subf %68, %60 : vector<8x128xf32>
    %70 = arith.mulf %69, %67 : vector<8x128xf32>
    %71 = arith.mulf %60, %42 : vector<8x128xf32>
    %72 = arith.addf %70, %71 : vector<8x128xf32>
    %73 = vector.extract_strided_slice %9 {offsets = [16, 0], sizes = [8, 384], strides = [1, 1]} : vector<32x384xf32> to vector<8x384xf32>
    %cst_21 = arith.constant dense<0.000000e+00> : vector<8x384xf32>
    %74 = tpu.matmul %72, %10, %cst_21 {dimension_numbers = #tpu.dot_dimension_numbers<[1], [0], [0], [1], [0, 0, 1, 1], [], []>} : vector<8x128xf32>, vector<128x384xf32>, vector<8x384xf32> -> vector<8x384xf32>
    %75 = vector.extract_strided_slice %73 {offsets = [0, 0], sizes = [8, 128], strides = [1, 1]} : vector<8x384xf32> to vector<8x128xf32>
    %76 = vector.extract_strided_slice %74 {offsets = [0, 0], sizes = [8, 128], strides = [1, 1]} : vector<8x384xf32> to vector<8x128xf32>
    %77 = arith.addf %75, %76 : vector<8x128xf32>
    %78 = arith.negf %77 : vector<8x128xf32>
    %79 = math.exp %78 : vector<8x128xf32>
    %cst_22 = arith.constant 1.000000e+00 : f32
    %80 = vector.broadcast %cst_22 : f32 to vector<8x128xf32>
    %81 = arith.addf %80, %79 : vector<8x128xf32>
    %82 = arith.divf %80, %81 : vector<8x128xf32>
    %83 = vector.extract_strided_slice %73 {offsets = [0, 128], sizes = [8, 128], strides = [1, 1]} : vector<8x384xf32> to vector<8x128xf32>
    %84 = vector.extract_strided_slice %74 {offsets = [0, 128], sizes = [8, 128], strides = [1, 1]} : vector<8x384xf32> to vector<8x128xf32>
    %85 = arith.addf %83, %84 : vector<8x128xf32>
    %86 = arith.negf %85 : vector<8x128xf32>
    %87 = math.exp %86 : vector<8x128xf32>
    %cst_23 = arith.constant 1.000000e+00 : f32
    %88 = vector.broadcast %cst_23 : f32 to vector<8x128xf32>
    %89 = arith.addf %88, %87 : vector<8x128xf32>
    %90 = arith.divf %88, %89 : vector<8x128xf32>
    %91 = vector.extract_strided_slice %73 {offsets = [0, 256], sizes = [8, 128], strides = [1, 1]} : vector<8x384xf32> to vector<8x128xf32>
    %92 = vector.extract_strided_slice %74 {offsets = [0, 256], sizes = [8, 128], strides = [1, 1]} : vector<8x384xf32> to vector<8x128xf32>
    %93 = vector.broadcast %11 : vector<1x128xf32> to vector<8x128xf32>
    %94 = arith.addf %92, %93 : vector<8x128xf32>
    %95 = arith.mulf %82, %94 : vector<8x128xf32>
    %96 = arith.addf %91, %95 : vector<8x128xf32>
    %97 = math.tanh %96 : vector<8x128xf32>
    %cst_24 = arith.constant 1.000000e+00 : f32
    %98 = vector.broadcast %cst_24 : f32 to vector<8x128xf32>
    %99 = arith.subf %98, %90 : vector<8x128xf32>
    %100 = arith.mulf %99, %97 : vector<8x128xf32>
    %101 = arith.mulf %90, %72 : vector<8x128xf32>
    %102 = arith.addf %100, %101 : vector<8x128xf32>
    %103 = vector.extract_strided_slice %9 {offsets = [24, 0], sizes = [8, 384], strides = [1, 1]} : vector<32x384xf32> to vector<8x384xf32>
    %cst_25 = arith.constant dense<0.000000e+00> : vector<8x384xf32>
    %104 = tpu.matmul %102, %10, %cst_25 {dimension_numbers = #tpu.dot_dimension_numbers<[1], [0], [0], [1], [0, 0, 1, 1], [], []>} : vector<8x128xf32>, vector<128x384xf32>, vector<8x384xf32> -> vector<8x384xf32>
    %105 = vector.extract_strided_slice %103 {offsets = [0, 0], sizes = [8, 128], strides = [1, 1]} : vector<8x384xf32> to vector<8x128xf32>
    %106 = vector.extract_strided_slice %104 {offsets = [0, 0], sizes = [8, 128], strides = [1, 1]} : vector<8x384xf32> to vector<8x128xf32>
    %107 = arith.addf %105, %106 : vector<8x128xf32>
    %108 = arith.negf %107 : vector<8x128xf32>
    %109 = math.exp %108 : vector<8x128xf32>
    %cst_26 = arith.constant 1.000000e+00 : f32
    %110 = vector.broadcast %cst_26 : f32 to vector<8x128xf32>
    %111 = arith.addf %110, %109 : vector<8x128xf32>
    %112 = arith.divf %110, %111 : vector<8x128xf32>
    %113 = vector.extract_strided_slice %103 {offsets = [0, 128], sizes = [8, 128], strides = [1, 1]} : vector<8x384xf32> to vector<8x128xf32>
    %114 = vector.extract_strided_slice %104 {offsets = [0, 128], sizes = [8, 128], strides = [1, 1]} : vector<8x384xf32> to vector<8x128xf32>
    %115 = arith.addf %113, %114 : vector<8x128xf32>
    %116 = arith.negf %115 : vector<8x128xf32>
    %117 = math.exp %116 : vector<8x128xf32>
    %cst_27 = arith.constant 1.000000e+00 : f32
    %118 = vector.broadcast %cst_27 : f32 to vector<8x128xf32>
    %119 = arith.addf %118, %117 : vector<8x128xf32>
    %120 = arith.divf %118, %119 : vector<8x128xf32>
    %121 = vector.extract_strided_slice %103 {offsets = [0, 256], sizes = [8, 128], strides = [1, 1]} : vector<8x384xf32> to vector<8x128xf32>
    %122 = vector.extract_strided_slice %104 {offsets = [0, 256], sizes = [8, 128], strides = [1, 1]} : vector<8x384xf32> to vector<8x128xf32>
    %123 = vector.broadcast %11 : vector<1x128xf32> to vector<8x128xf32>
    %124 = arith.addf %122, %123 : vector<8x128xf32>
    %125 = arith.mulf %112, %124 : vector<8x128xf32>
    %126 = arith.addf %121, %125 : vector<8x128xf32>
    %127 = math.tanh %126 : vector<8x128xf32>
    %cst_28 = arith.constant 1.000000e+00 : f32
    %128 = vector.broadcast %cst_28 : f32 to vector<8x128xf32>
    %129 = arith.subf %128, %120 : vector<8x128xf32>
    %130 = arith.mulf %129, %127 : vector<8x128xf32>
    %131 = arith.mulf %120, %102 : vector<8x128xf32>
    %132 = arith.addf %130, %131 : vector<8x128xf32>
    %c0_29 = arith.constant 0 : index
    %c0_30 = arith.constant 0 : index
    %133 = vector.load %arg6[%c0_29, %c0_30] : memref<8x128xf32, #tpu.memory_space<vmem>>, vector<8x128xf32>
    tpu.vector_store %arg6[%c0_29, %c0_30], %132 {strides = array<i32>} : memref<8x128xf32, #tpu.memory_space<vmem>>, vector<8x128xf32>,
    return
  }
  func.func @transform_0(%arg0: i32) -> (i32, i32, i32) {
    %c0_i32 = arith.constant 0 : i32
    %c0_i32_0 = arith.constant 0 : i32
    %c0_i32_1 = arith.constant 0 : i32
    return %arg0, %c0_i32, %c0_i32_0 : i32, i32, i32
  }
  func.func @transform_1(%arg0: i32) -> (i32, i32) {
    %c0_i32 = arith.constant 0 : i32
    %c0_i32_0 = arith.constant 0 : i32
    %c0_i32_1 = arith.constant 0 : i32
    return %c0_i32, %c0_i32_0 : i32, i32
  }
  func.func @transform_2(%arg0: i32) -> (i32, i32) {
    %c0_i32 = arith.constant 0 : i32
    %c0_i32_0 = arith.constant 0 : i32
    %c0_i32_1 = arith.constant 0 : i32
    return %c0_i32, %c0_i32_0 : i32, i32
  }
  func.func @transform_3(%arg0: i32) -> (i32, i32) {
    %c0_i32 = arith.constant 0 : i32
    %c0_i32_0 = arith.constant 0 : i32
    %c0_i32_1 = arith.constant 0 : i32
    return %c0_i32, %c0_i32_0 : i32, i32
  }
  func.func @transform_4(%arg0: i32) -> (i32, i32) {
    %c0_i32 = arith.constant 0 : i32
    %c0_i32_0 = arith.constant 0 : i32
    %c0_i32_1 = arith.constant 0 : i32
    return %c0_i32, %c0_i32_0 : i32, i32
  }
  func.func @transform_5(%arg0: i32) -> (i32, i32) {
    %c0_i32 = arith.constant 0 : i32
    %c0_i32_0 = arith.constant 0 : i32
    %c0_i32_1 = arith.constant 0 : i32
    return %c0_i32, %c0_i32_0 : i32, i32
  }
}

</mosaic_0001>

<llo_original>
// kernel: tpu_custom_call.1
$region0: #{tpu_custom_call.1}
  #allocation0 [shape = 'u32[]', space=smem, size = 0x4, offset = 0x4, fixed_abs, tag = 'smem constant byte address 0x4 - core index']
  #allocation1 [shape = 'u32[144,128]{1,0:T(1,128)}', space=vmem, size = 0x12000, scoped, tag = 'internal scratch']
  %s0 = inlined_call_operand.hbm [shape: f32[8,8,64], index: 0, kind: input, shape index: {}]
  %s1 = inlined_call_operand.hbm [shape: f32[64,384], index: 1, kind: input, shape index: {}]
  %s2 = inlined_call_operand.hbm [shape: f32[128,384], index: 2, kind: input, shape index: {}]
  %s3 = inlined_call_operand.vmem [shape: f32[1,384], index: 3, kind: input, shape index: {}]
  %s4 = inlined_call_operand.vmem [shape: f32[1,128], index: 4, kind: input, shape index: {}]
  %s5 = inlined_call_operand.hbm [shape: f32[8,128], index: 5, kind: output, shape index: {}]
  %s6 = sld [smem:[#allocation0]]
  $region69: #{tpu_custom_call.1} parent=0
    _
  %s8 = ssub.s32 1, %s6
  %s9 = scalar_select 0, %s8, %s6
  $region1: #{tpu_custom_call.1} parent=0
    #allocation2 [shape = 'u8[32768]{0}', space=vmem, size = 0x8000, scoped, tag = 'input window, operand 0']
    #allocation3 [shape = 's32[2]{0}', space=sflag, size = 0x8, scoped, tag = 'scoped memory for tpu_custom_call.1']
    #allocation4 [shape = 's32[2]{0}', space=sflag, size = 0x8, scoped, tag = 'scoped memory for tpu_custom_call.1']
    #allocation5 [shape = 'u8[98304]{0}', space=vmem, size = 0x18000, scoped, tag = 'input window, operand 1, single buffered']
    #allocation6 [shape = 's32[1]{0}', space=sflag, size = 0x4, scoped, tag = 'scoped memory for tpu_custom_call.1']
    #allocation7 [shape = 'u8[196608]{0}', space=vmem, size = 0x30000, scoped, tag = 'input window, operand 2, single buffered']
    #allocation8 [shape = 'u8[4096]{0}', space=vmem, size = 0x1000, scoped, tag = 'output window, operand 0, single buffered']
    %10 = vsyncpa [#allocation3], 0
    %s11 = scalar_lea.sflag [#allocation3], 1
    %12 = vsyncpa %s11, 0
    %13 = vsyncpa [#allocation6], 0
    %14 = vsyncpa [#allocation4], 0
    loop: start=0, step=1, limit=4
    $region2: #{tpu_custom_call.1} parent=1 // loop_pre_header
      _
    $region3: #{tpu_custom_call.1} parent=1 // loop_header
      %s16 = sphi 0, %s20
      %p17 = scmp.ge.s32.totalorder %s16, 4
      %s26 = sphi 0, %s28
      %s29 = sphi 0, %s26
      %s30 = sphi 0, %s29
      %s46 = sphi 0, %s30
      %s50 = sphi 0, %s50
      %s52 = sphi 0, %s50
      %s53 = sphi 0, %s52
      %s67 = sphi 0, %s53
      %s71 = sphi 0, %s71
      %s73 = sphi 0, %s71
      %s74 = sphi 0, %s73
      %s88 = sphi 0, %s74
      %s92 = sphi 0, %s92
      %s94 = sphi 0, %s92
      %s95 = sphi 0, %s94
      %s109 = sphi 0, %s95
      %s113 = sphi 0, %s113
      %s115 = sphi 0, %s113
      %s116 = sphi 0, %s115
      %s130 = sphi 0, %s116
      %s134 = sphi 0, %s134
      %s136 = sphi 0, %s134
      %s137 = sphi 0, %s136
      %s151 = sphi 0, %s137
    $region4: #{tpu_custom_call.1} parent=1 // loop_header_branch
      %19 = sbr.rel (%p17) target = $region8
    $region5: #{tpu_custom_call.1} parent=1 // loop_body
      %s21 = ssub.s32 %s16, 1
      %s22 = ssub.s32 %s16, 2
      %s23 = sadd.s32 %s16, 1
      %s24 = ssub.s32 %s16, %s23
      %p25 = scmp.eq.s32.totalorder %s24, 0
      %s27 = sadd.s32 %s26, 1
      %s28 = scalar_select %p25, %s26, %s27
      %p31 = pneg %p25
      %p32 = scmp.eq.s32.totalorder %s16, 1
      %p33 = por %p31, %p32
      %p34 = scmp.ne.s32.totalorder %s26, %s29
      %p35 = scmp.eq.s32.totalorder %s16, 0
      %p36 = por %p34, %p35
      %p37 = scmp.ne.s32.totalorder %s26, %s29
      %p38 = scmp.eq.s32.totalorder %s21, 1
      %p39 = por %p37, %p38
      %p40 = scmp.ne.s32.totalorder %s29, %s30
      %p41 = scmp.eq.s32.totalorder %s21, 0
      %p42 = por %p40, %p41
      %p43 = scmp.ne.s32.totalorder %s29, %s30
      %p44 = scmp.eq.s32.totalorder %s22, 1
      %p45 = por %p43, %p44
      %p47 = scmp.ne.s32.totalorder %s30, %s46
      %p48 = scmp.eq.s32.totalorder %s22, 0
      %p49 = por %p47, %p48
      %s51 = sadd.s32 %s50, 1
      %p54 = scmp.eq.s32.totalorder %s16, 1
      %p55 = scmp.ne.s32.totalorder %s50, %s52
      %p56 = scmp.eq.s32.totalorder %s16, 0
      %p57 = por %p55, %p56
      %p58 = scmp.ne.s32.totalorder %s50, %s52
      %p59 = scmp.eq.s32.totalorder %s21, 1
      %p60 = por %p58, %p59
      %p61 = scmp.ne.s32.totalorder %s52, %s53
      %p62 = scmp.eq.s32.totalorder %s21, 0
      %p63 = por %p61, %p62
      %p64 = scmp.ne.s32.totalorder %s52, %s53
      %p65 = scmp.eq.s32.totalorder %s22, 1
      %p66 = por %p64, %p65
      %p68 = scmp.ne.s32.totalorder %s53, %s67
      %p69 = scmp.eq.s32.totalorder %s22, 0
      %p70 = por %p68, %p69
      %s72 = sadd.s32 %s71, 1
      %p75 = scmp.eq.s32.totalorder %s16, 1
      %p76 = scmp.ne.s32.totalorder %s71, %s73
      %p77 = scmp.eq.s32.totalorder %s16, 0
      %p78 = por %p76, %p77
      %p79 = scmp.ne.s32.totalorder %s71, %s73
      %p80 = scmp.eq.s32.totalorder %s21, 1
      %p81 = por %p79, %p80
      %p82 = scmp.ne.s32.totalorder %s73, %s74
      %p83 = scmp.eq.s32.totalorder %s21, 0
      %p84 = por %p82, %p83
      %p85 = scmp.ne.s32.totalorder %s73, %s74
      %p86 = scmp.eq.s32.totalorder %s22, 1
      %p87 = por %p85, %p86
      %p89 = scmp.ne.s32.totalorder %s74, %s88
      %p90 = scmp.eq.s32.totalorder %s22, 0
      %p91 = por %p89, %p90
      %s93 = sadd.s32 %s92, 1
      %p96 = scmp.eq.s32.totalorder %s16, 1
      %p97 = scmp.ne.s32.totalorder %s92, %s94
      %p98 = scmp.eq.s32.totalorder %s16, 0
      %p99 = por %p97, %p98
      %p100 = scmp.ne.s32.totalorder %s92, %s94
      %p101 = scmp.eq.s32.totalorder %s21, 1
      %p102 = por %p100, %p101
      %p103 = scmp.ne.s32.totalorder %s94, %s95
      %p104 = scmp.eq.s32.totalorder %s21, 0
      %p105 = por %p103, %p104
      %p106 = scmp.ne.s32.totalorder %s94, %s95
      %p107 = scmp.eq.s32.totalorder %s22, 1
      %p108 = por %p106, %p107
      %p110 = scmp.ne.s32.totalorder %s95, %s109
      %p111 = scmp.eq.s32.totalorder %s22, 0
      %p112 = por %p110, %p111
      %s114 = sadd.s32 %s113, 1
      %p117 = scmp.eq.s32.totalorder %s16, 1
      %p118 = scmp.ne.s32.totalorder %s113, %s115
      %p119 = scmp.eq.s32.totalorder %s16, 0
      %p120 = por %p118, %p119
      %p121 = scmp.ne.s32.totalorder %s113, %s115
      %p122 = scmp.eq.s32.totalorder %s21, 1
      %p123 = por %p121, %p122
      %p124 = scmp.ne.s32.totalorder %s115, %s116
      %p125 = scmp.eq.s32.totalorder %s21, 0
      %p126 = por %p124, %p125
      %p127 = scmp.ne.s32.totalorder %s115, %s116
      %p128 = scmp.eq.s32.totalorder %s22, 1
      %p129 = por %p127, %p128
      %p131 = scmp.ne.s32.totalorder %s116, %s130
      %p132 = scmp.eq.s32.totalorder %s22, 0
      %p133 = por %p131, %p132
      %s135 = sadd.s32 %s134, 1
      %p138 = scmp.eq.s32.totalorder %s16, 1
      %p139 = scmp.ne.s32.totalorder %s134, %s136
      %p140 = scmp.eq.s32.totalorder %s16, 0
      %p141 = por %p139, %p140
      %p142 = scmp.ne.s32.totalorder %s134, %s136
      %p143 = scmp.eq.s32.totalorder %s21, 1
      %p144 = por %p142, %p143
      %p145 = scmp.ne.s32.totalorder %s136, %s137
      %p146 = scmp.eq.s32.totalorder %s21, 0
      %p147 = por %p145, %p146
      %p148 = scmp.ne.s32.totalorder %s136, %s137
      %p149 = scmp.eq.s32.totalorder %s22, 1
      %p150 = por %p148, %p149
      %p152 = scmp.ne.s32.totalorder %s137, %s151
      %p153 = scmp.eq.s32.totalorder %s22, 0
      %p154 = por %p152, %p153
      %p155 = scmp.le.s32.totalorder 1, %s16
      %p156 = scmp.lt.s32.totalorder %s16, 3
      %p157 = pnand %p155, %p156
      %p158 = pneg %p157
      // Predicated region
      $region9: #{tpu_custom_call.1} parent=5 // pred_check
        _
      $region10: #{tpu_custom_call.1} parent=5 // pred_check_branch
        %160 = sbr.rel (%p157) target = $region12
      $region11: #{tpu_custom_call.1} parent=5 // pred_region
        %s161 = ssub.s32 %s16, 1
        // Predicated region
        $region13: #{tpu_custom_call.1} parent=11 // pred_check
          %p162 = pneg %p63
        $region14: #{tpu_custom_call.1} parent=11 // pred_check_branch
          %164 = sbr.rel (%p162) target = $region16
        $region15: #{tpu_custom_call.1} parent=11 // pred_region
          %s166 = ssub.s32 3072, 3072
          %167 = vsyncadd [#allocation6], %s166
          %s168 = sshll.u32 [#allocation5], 4
          %s169 = int_to_ptr.vmem [resolvable:$true] %s168
          %174 = dma.hbm_to_vmem [thread:$0]  %s1, 3072, %s169, [#allocation6], 384, 384, 24
        $region16: #{tpu_custom_call.1} parent=11 // pred_fallthru
          _
        // Predicated region
        $region17: #{tpu_custom_call.1} parent=11 // pred_check
          %p175 = pneg %p84
        $region18: #{tpu_custom_call.1} parent=11 // pred_check_branch
          %177 = sbr.rel (%p175) target = $region20
        $region19: #{tpu_custom_call.1} parent=11 // pred_region
          %s179 = ssub.s32 6144, 6144
          %180 = vsyncadd [#allocation6], %s179
          %s181 = sshll.u32 [#allocation7], 4
          %s182 = int_to_ptr.vmem [resolvable:$true] %s181
          %187 = dma.hbm_to_vmem [thread:$0]  %s2, 6144, %s182, [#allocation6], 384, 384, 24
        $region20: #{tpu_custom_call.1} parent=11 // pred_fallthru
          _
        // Predicated region
        $region21: #{tpu_custom_call.1} parent=11 // pred_check
          %p188 = pneg %p105
        $region22: #{tpu_custom_call.1} parent=11 // pred_check_branch
          %190 = sbr.rel (%p188) target = $region24
        $region23: #{tpu_custom_call.1} parent=11 // pred_region
          _
        $region24: #{tpu_custom_call.1} parent=11 // pred_fallthru
          _
        // Predicated region
        $region25: #{tpu_custom_call.1} parent=11 // pred_check
          %p191 = pneg %p126
        $region26: #{tpu_custom_call.1} parent=11 // pred_check_branch
          %193 = sbr.rel (%p191) target = $region28
        $region27: #{tpu_custom_call.1} parent=11 // pred_region
          _
        $region28: #{tpu_custom_call.1} parent=11 // pred_fallthru
          _
      $region12: #{tpu_custom_call.1} parent=5 // pred_fallthru
        _
      %p194 = scmp.lt.s32.totalorder %s16, 2
      // Predicated region
      $region29: #{tpu_custom_call.1} parent=5 // pred_check
        %p195 = pneg %p194
      $region30: #{tpu_custom_call.1} parent=5 // pred_check_branch
        %197 = sbr.rel (%p195) target = $region32
      $region31: #{tpu_custom_call.1} parent=5 // pred_region
        // Predicated region
        $region33: #{tpu_custom_call.1} parent=31 // pred_check
          %p198 = pneg %p36
        $region34: #{tpu_custom_call.1} parent=31 // pred_check_branch
          %200 = sbr.rel (%p198) target = $region36
        $region35: #{tpu_custom_call.1} parent=31 // pred_region
          %s201 = sand.u32 %s26, 1
          %s202 = scalar_lea.sflag [#allocation3], %s201
          %s203 = sand.u32 %s26, 1
          %s204 = smul.addr %s203, 32
          %s205 = scalar_lea.vmem [#allocation2], %s204
          %s206 = smul.u32 4, %s16
          %s208 = ssub.s32 512, 512
          %209 = vsyncadd %s202, %s208
          %s210 = smul.addr %s206, 128
          %s211 = scalar_lea.hbm %s0, %s210
          %s212 = sshll.u32 %s205, 4
          %s213 = int_to_ptr.vmem [resolvable:$true] %s212
          %218 = dma.hbm_to_vmem [thread:$0]  %s211, 512, %s213, %s202, 128, 128, 8
        $region36: #{tpu_custom_call.1} parent=31 // pred_fallthru
          _
      $region32: #{tpu_custom_call.1} parent=5 // pred_fallthru
        _
      %p219 = scmp.le.s32.totalorder 1, %s16
      %p220 = scmp.lt.s32.totalorder %s16, 3
      %p221 = pnand %p219, %p220
      %p222 = pneg %p221
      // Predicated region
      $region37: #{tpu_custom_call.1} parent=5 // pred_check
        _
      $region38: #{tpu_custom_call.1} parent=5 // pred_check_branch
        %224 = sbr.rel (%p221) target = $region40
      $region39: #{tpu_custom_call.1} parent=5 // pred_region
        %s225 = ssub.s32 %s16, 1
        %s226 = sand.u32 %s29, 1
        %s227 = scalar_lea.sflag [#allocation3], %s226
        %s228 = sand.u32 %s29, 1
        %s229 = smul.addr %s228, 32
        %s230 = scalar_lea.vmem [#allocation2], %s229
        // Predicated region
        $region41: #{tpu_custom_call.1} parent=39 // pred_check
          %p231 = pneg %p42
        $region42: #{tpu_custom_call.1} parent=39 // pred_check_branch
          %233 = sbr.rel (%p231) target = $region44
        $region43: #{tpu_custom_call.1} parent=39 // pred_region
          %234 = dma.done %s227, 512
        $region44: #{tpu_custom_call.1} parent=39 // pred_fallthru
          _
        // Predicated region
        $region45: #{tpu_custom_call.1} parent=39 // pred_check
          %p235 = pneg %p63
        $region46: #{tpu_custom_call.1} parent=39 // pred_check_branch
          %237 = sbr.rel (%p235) target = $region48
        $region47: #{tpu_custom_call.1} parent=39 // pred_region
          %238 = dma.done [#allocation6], 3072
        $region48: #{tpu_custom_call.1} parent=39 // pred_fallthru
          _
        // Predicated region
        $region49: #{tpu_custom_call.1} parent=39 // pred_check
          %p239 = pneg %p84
        $region50: #{tpu_custom_call.1} parent=39 // pred_check_branch
          %241 = sbr.rel (%p239) target = $region52
        $region51: #{tpu_custom_call.1} parent=39 // pred_region
          %242 = dma.done [#allocation6], 6144
        $region52: #{tpu_custom_call.1} parent=39 // pred_fallthru
          _
        %s243 = sand.u32 %s29, 1
        %s244 = scalar_lea.sflag [#allocation3], %s243
        %s245 = sand.u32 %s29, 1
        %s246 = smul.addr %s245, 32
        %s247 = scalar_lea.vmem [#allocation2], %s246
        %p248 = pneg %p42
        %p249 = pneg %p39
        %p250 = pneg %p63
        %p251 = pneg %p60
        %p252 = pneg %p84
        %p253 = pneg %p81
        %p254 = pneg %p105
        %p255 = pneg %p102
        %p256 = pneg %p126
        %p257 = pneg %p123
        %p258 = pneg %p147
        %p259 = pneg %p144
        %s260 = smul.u32 4, %s21
        %p261 = scmp.eq.s32.totalorder %s21, 0
        // Predicated region
        $region53: #{tpu_custom_call.1} parent=39 // pred_check
          %p262 = pneg %p261
        $region54: #{tpu_custom_call.1} parent=39 // pred_check_branch
          %264 = sbr.rel (%p262) target = $region56
        $region55: #{tpu_custom_call.1} parent=39 // pred_region
          %265 = vst [vmem:[#allocation8] sm:$0xff] 0.0
        $region56: #{tpu_custom_call.1} parent=39 // pred_fallthru
          _
        %v266 = vld [vmem:[%s230] sm:$0xff]
        %v267 = vld [vmem:[%s230 + $0x8] sm:$0xff]
        %v268 = vld [vmem:[%s230 + $0x10] sm:$0xff]
        %v269 = vld [vmem:[%s230 + $0x18] sm:$0xff]
        %v270 = vld [vmem:[#allocation5] sm:$0xff]
        %v271 = vld [vmem:[#allocation5 + $0x8] sm:$0xff]
        %v272 = vld [vmem:[#allocation5 + $0x10] sm:$0xff]
        %v273 = vld [vmem:[#allocation5 + $0x18] sm:$0xff]
        %v274 = vld [vmem:[#allocation5 + $0x20] sm:$0xff]
        %v275 = vld [vmem:[#allocation5 + $0x28] sm:$0xff]
        %v276 = vld [vmem:[#allocation5 + $0x30] sm:$0xff]
        %v277 = vld [vmem:[#allocation5 + $0x38] sm:$0xff]
        %v278 = vld [vmem:[#allocation5 + $0x40] sm:$0xff]
        %v279 = vld [vmem:[#allocation5 + $0x48] sm:$0xff]
        %v280 = vld [vmem:[#allocation5 + $0x50] sm:$0xff]
        %v281 = vld [vmem:[#allocation5 + $0x58] sm:$0xff]
        %v282 = vld [vmem:[#allocation5 + $0x60] sm:$0xff]
        %v283 = vld [vmem:[#allocation5 + $0x68] sm:$0xff]
        %v284 = vld [vmem:[#allocation5 + $0x70] sm:$0xff]
        %v285 = vld [vmem:[#allocation5 + $0x78] sm:$0xff]
        %v286 = vld [vmem:[#allocation5 + $0x80] sm:$0xff]
        %v287 = vld [vmem:[#allocation5 + $0x88] sm:$0xff]
        %v288 = vld [vmem:[#allocation5 + $0x90] sm:$0xff]
        %v289 = vld [vmem:[#allocation5 + $0x98] sm:$0xff]
        %v290 = vld [vmem:[#allocation5 + $0xa0] sm:$0xff]
        %v291 = vld [vmem:[#allocation5 + $0xa8] sm:$0xff]
        %v292 = vld [vmem:[#allocation5 + $0xb0] sm:$0xff]
        %v293 = vld [vmem:[#allocation5 + $0xb8] sm:$0xff]
        %v294 = vld [vmem:[%s3] sm:$0x7]
        %v296 = vlaneseq
        %v297 = vshrl.u32 %v296, 7
        %v298 = vsub.s32 0, %v297
        %v299 = vrot.slane %v294, %v298
        %v300 = vlaneseq
        %v301 = vshrl.u32 %v300, 7
        %v302 = vsub.s32 1, %v301
        %v303 = vrot.slane %v294, %v302
        %v304 = vlaneseq
        %v305 = vshrl.u32 %v304, 7
        %v306 = vsub.s32 2, %v305
        %v307 = vrot.slane %v294, %v306
        %vm311 = vcmask 523264
        %v313 = vsel %vm311, %v266, 0
        %v316 = vsel %vm311, %v267, 0
        %v319 = vsel %vm311, %v268, 0
        %v322 = vsel %vm311, %v269, 0
        %324 = vmatprep.subr.mxu0 0.0
        %325 = vmatpush1.msra.mxu0 0.0
        %326 = vmatprep.subr.mxu0 0.0
        %327 = vmatpush1.msra.mxu0 0.0
        %328 = vmatprep.subr.mxu0 0.0
        %329 = vmatpush1.msra.mxu0 0.0
        %330 = vmatprep.subr.mxu0 0.0
        %331 = vmatpush1.msra.mxu0 0.0
        %332 = vmatprep.subr.mxu0 0.0
        %333 = vmatpush1.msra.mxu0 0.0
        %334 = vmatprep.subr.mxu0 0.0
        %335 = vmatpush1.msra.mxu0 0.0
        %336 = vmatprep.subr.mxu0 0.0
        %337 = vmatpush1.msra.mxu0 0.0
        %338 = vmatprep.subr.mxu0 0.0
        %339 = vmatpush1.msra.mxu0 0.0
        %340 = vmatprep.subr.mxu0 %v292
        %341 = vmatpush1.msra.mxu0 %v291
        %342 = vmatprep.subr.mxu0 %v289
        %343 = vmatpush1.msra.mxu0 %v288
        %344 = vmatprep.subr.mxu0 %v286
        %345 = vmatpush1.msra.mxu0 %v285
        %346 = vmatprep.subr.mxu0 %v283
        %347 = vmatpush1.msra.mxu0 %v282
        %348 = vmatprep.subr.mxu0 %v280
        %349 = vmatpush1.msra.mxu0 %v279
        %350 = vmatprep.subr.mxu0 %v277
        %351 = vmatpush1.msra.mxu0 %v276
        %352 = vmatprep.subr.mxu0 %v274
        %353 = vmatpush1.msra.mxu0 %v273
        %354 = vmatprep.subr.mxu0 %v271
        %355 = vmatpush1.msra.mxu0 %v270
        %356 = vmatprep.subr.mxu0 0.0
        %357 = vmatpush2.msra.mxu0 0.0
        %358 = vmatprep.subr.mxu0 0.0
        %359 = vmatpush2.msra.mxu0 0.0
        %360 = vmatprep.subr.mxu0 0.0
        %361 = vmatpush2.msra.mxu0 0.0
        %362 = vmatprep.subr.mxu0 0.0
        %363 = vmatpush2.msra.mxu0 0.0
        %364 = vmatprep.subr.mxu0 0.0
        %365 = vmatpush2.msra.mxu0 0.0
        %366 = vmatprep.subr.mxu0 0.0
        %367 = vmatpush2.msra.mxu0 0.0
        %368 = vmatprep.subr.mxu0 0.0
        %369 = vmatpush2.msra.mxu0 0.0
        %370 = vmatprep.subr.mxu0 0.0
        %371 = vmatpush2.msra.mxu0 0.0
        %372 = vmatprep.subr.mxu0 0.0
        %373 = vmatpush2.msra.mxu0 0.0
        %374 = vmatprep.subr.mxu0 0.0
        %375 = vmatpush2.msra.mxu0 0.0
        %376 = vmatprep.subr.mxu0 0.0
        %377 = vmatpush2.msra.mxu0 0.0
        %378 = vmatprep.subr.mxu0 0.0
        %379 = vmatpush2.msra.mxu0 0.0
        %380 = vmatprep.subr.mxu0 0.0
        %381 = vmatpush2.msra.mxu0 0.0
        %382 = vmatprep.subr.mxu0 0.0
        %383 = vmatpush2.msra.mxu0 0.0
        %384 = vmatprep.subr.mxu0 0.0
        %385 = vmatpush2.msra.mxu0 0.0
        %386 = vmatprep.subr.mxu0 0.0
        %387 = vmatpush2.msra.mxu0 0.0
        %388 = vmatprep.mubr.f32.mxu0 0.0
        %389 = vmatmul.mubr.f32.gmra.mxu0 %v313
        %v390 = vpop.f32.mrf.mxu0
        %v391 = vadd.f32 %v299, %v390
        %v392 = vpop.f32.mrf.mxu0
        %v393 = vadd.f32 %v303, %v392
        %394 = vmatprep.mubr.f32.mxu0 0.0
        %395 = vmatmul.mubr.f32.gmra.mxu0 %v316
        %v396 = vpop.f32.mrf.mxu0
        %v397 = vadd.f32 %v299, %v396
        %v398 = vpop.f32.mrf.mxu0
        %v399 = vadd.f32 %v303, %v398
        %400 = vmatprep.mubr.f32.mxu0 0.0
        %401 = vmatmul.mubr.f32.gmra.mxu0 %v319
        %v402 = vpop.f32.mrf.mxu0
        %v403 = vadd.f32 %v299, %v402
        %v404 = vpop.f32.mrf.mxu0
        %v405 = vadd.f32 %v303, %v404
        %406 = vmatprep.mubr.f32.mxu0 0.0
        %407 = vmatmul.mubr.f32.gmra.mxu0 %v322
        %v408 = vpop.f32.mrf.mxu0
        %v409 = vadd.f32 %v299, %v408
        %v410 = vpop.f32.mrf.mxu0
        %v411 = vadd.f32 %v303, %v410
        %412 = vdwg.mxu0
        %413 = vmatprep.subr.mxu0 0.0
        %414 = vmatpush1.msra.mxu0 0.0
        %415 = vmatprep.subr.mxu0 0.0
        %416 = vmatpush1.msra.mxu0 0.0
        %417 = vmatprep.subr.mxu0 0.0
        %418 = vmatpush1.msra.mxu0 0.0
        %419 = vmatprep.subr.mxu0 0.0
        %420 = vmatpush1.msra.mxu0 0.0
        %421 = vmatprep.subr.mxu0 0.0
        %422 = vmatpush1.msra.mxu0 0.0
        %423 = vmatprep.subr.mxu0 0.0
        %424 = vmatpush1.msra.mxu0 0.0
        %425 = vmatprep.subr.mxu0 0.0
        %426 = vmatpush1.msra.mxu0 0.0
        %427 = vmatprep.subr.mxu0 0.0
        %428 = vmatpush1.msra.mxu0 0.0
        %429 = vmatprep.subr.mxu0 0.0
        %430 = vmatpush1.msra.mxu0 %v293
        %431 = vmatprep.subr.mxu0 0.0
        %432 = vmatpush1.msra.mxu0 %v290
        %433 = vmatprep.subr.mxu0 0.0
        %434 = vmatpush1.msra.mxu0 %v287
        %435 = vmatprep.subr.mxu0 0.0
        %436 = vmatpush1.msra.mxu0 %v284
        %437 = vmatprep.subr.mxu0 0.0
        %438 = vmatpush1.msra.mxu0 %v281
        %439 = vmatprep.subr.mxu0 0.0
        %440 = vmatpush1.msra.mxu0 %v278
        %441 = vmatprep.subr.mxu0 0.0
        %442 = vmatpush1.msra.mxu0 %v275
        %443 = vmatprep.subr.mxu0 0.0
        %444 = vmatpush1.msra.mxu0 %v272
        %445 = vmatprep.subr.mxu0 0.0
        %446 = vmatpush2.msra.mxu0 0.0
        %447 = vmatprep.subr.mxu0 0.0
        %448 = vmatpush2.msra.mxu0 0.0
        %449 = vmatprep.subr.mxu0 0.0
        %450 = vmatpush2.msra.mxu0 0.0
        %451 = vmatprep.subr.mxu0 0.0
        %452 = vmatpush2.msra.mxu0 0.0
        %453 = vmatprep.subr.mxu0 0.0
        %454 = vmatpush2.msra.mxu0 0.0
        %455 = vmatprep.subr.mxu0 0.0
        %456 = vmatpush2.msra.mxu0 0.0
        %457 = vmatprep.subr.mxu0 0.0
        %458 = vmatpush2.msra.mxu0 0.0
        %459 = vmatprep.subr.mxu0 0.0
        %460 = vmatpush2.msra.mxu0 0.0
        %461 = vmatprep.subr.mxu0 0.0
        %462 = vmatpush2.msra.mxu0 0.0
        %463 = vmatprep.subr.mxu0 0.0
        %464 = vmatpush2.msra.mxu0 0.0
        %465 = vmatprep.subr.mxu0 0.0
        %466 = vmatpush2.msra.mxu0 0.0
        %467 = vmatprep.subr.mxu0 0.0
        %468 = vmatpush2.msra.mxu0 0.0
        %469 = vmatprep.subr.mxu0 0.0
        %470 = vmatpush2.msra.mxu0 0.0
        %471 = vmatprep.subr.mxu0 0.0
        %472 = vmatpush2.msra.mxu0 0.0
        %473 = vmatprep.subr.mxu0 0.0
        %474 = vmatpush2.msra.mxu0 0.0
        %475 = vmatprep.subr.mxu0 0.0
        %476 = vmatpush2.msra.mxu0 0.0
        %477 = vmatprep.mubr.f32.mxu0 0.0
        %478 = vmatmul.mubr.f32.gmra.mxu0 %v313
        %v479 = vpop.f32.mrf.mxu0
        %v480 = vadd.f32 %v307, %v479
        %v481 = vpop.f32.mrf.mxu0
        %482 = vmatprep.mubr.f32.mxu0 0.0
        %483 = vmatmul.mubr.f32.gmra.mxu0 %v316
        %v484 = vpop.f32.mrf.mxu0
        %v485 = vadd.f32 %v307, %v484
        %v486 = vpop.f32.mrf.mxu0
        %487 = vmatprep.mubr.f32.mxu0 0.0
        %488 = vmatmul.mubr.f32.gmra.mxu0 %v319
        %v489 = vpop.f32.mrf.mxu0
        %v490 = vadd.f32 %v307, %v489
        %v491 = vpop.f32.mrf.mxu0
        %492 = vmatprep.mubr.f32.mxu0 0.0
        %493 = vmatmul.mubr.f32.gmra.mxu0 %v322
        %v494 = vpop.f32.mrf.mxu0
        %v495 = vadd.f32 %v307, %v494
        %v496 = vpop.f32.mrf.mxu0
        %497 = vdwg.mxu0
        %v498 = vld [vmem:[#allocation7] sm:$0xff]
        %v499 = vld [vmem:[#allocation7 + $0x8] sm:$0xff]
        %v500 = vld [vmem:[#allocation7 + $0x10] sm:$0xff]
        %v501 = vld [vmem:[#allocation7 + $0x18] sm:$0xff]
        %v502 = vld [vmem:[#allocation7 + $0x20] sm:$0xff]
        %v503 = vld [vmem:[#allocation7 + $0x28] sm:$0xff]
        %v504 = vld [vmem:[#allocation7 + $0x30] sm:$0xff]
        %v505 = vld [vmem:[#allocation7 + $0x38] sm:$0xff]
        %v506 = vld [vmem:[#allocation7 + $0x40] sm:$0xff]
        %v507 = vld [vmem:[#allocation7 + $0x48] sm:$0xff]
        %v508 = vld [vmem:[#allocation7 + $0x50] sm:$0xff]
        %v509 = vld [vmem:[#allocation7 + $0x58] sm:$0xff]
        %v510 = vld [vmem:[#allocation7 + $0x60] sm:$0xff]
        %v511 = vld [vmem:[#allocation7 + $0x68] sm:$0xff]
        %v512 = vld [vmem:[#allocation7 + $0x70] sm:$0xff]
        %v513 = vld [vmem:[#allocation7 + $0x78] sm:$0xff]
        %v514 = vld [vmem:[#allocation7 + $0x80] sm:$0xff]
        %v515 = vld [vmem:[#allocation7 + $0x88] sm:$0xff]
        %v516 = vld [vmem:[#allocation7 + $0x90] sm:$0xff]
        %v517 = vld [vmem:[#allocation7 + $0x98] sm:$0xff]
        %v518 = vld [vmem:[#allocation7 + $0xa0] sm:$0xff]
        %v519 = vld [vmem:[#allocation7 + $0xa8] sm:$0xff]
        %v520 = vld [vmem:[#allocation7 + $0xb0] sm:$0xff]
        %v521 = vld [vmem:[#allocation7 + $0xb8] sm:$0xff]
        %v522 = vld [vmem:[#allocation7 + $0xc0] sm:$0xff]
        %v523 = vld [vmem:[#allocation7 + $0xc8] sm:$0xff]
        %v524 = vld [vmem:[#allocation7 + $0xd0] sm:$0xff]
        %v525 = vld [vmem:[#allocation7 + $0xd8] sm:$0xff]
        %v526 = vld [vmem:[#allocation7 + $0xe0] sm:$0xff]
        %v527 = vld [vmem:[#allocation7 + $0xe8] sm:$0xff]
        %v528 = vld [vmem:[#allocation7 + $0xf0] sm:$0xff]
        %v529 = vld [vmem:[#allocation7 + $0xf8] sm:$0xff]
        %v530 = vld [vmem:[#allocation7 + $0x100] sm:$0xff]
        %v531 = vld [vmem:[#allocation7 + $0x108] sm:$0xff]
        %v532 = vld [vmem:[#allocation7 + $0x110] sm:$0xff]
        %v533 = vld [vmem:[#allocation7 + $0x118] sm:$0xff]
        %v534 = vld [vmem:[#allocation7 + $0x120] sm:$0xff]
        %v535 = vld [vmem:[#allocation7 + $0x128] sm:$0xff]
        %v536 = vld [vmem:[#allocation7 + $0x130] sm:$0xff]
        %v537 = vld [vmem:[#allocation7 + $0x138] sm:$0xff]
        %v538 = vld [vmem:[#allocation7 + $0x140] sm:$0xff]
        %v539 = vld [vmem:[#allocation7 + $0x148] sm:$0xff]
        %v540 = vld [vmem:[#allocation7 + $0x150] sm:$0xff]
        %v541 = vld [vmem:[#allocation7 + $0x158] sm:$0xff]
        %v542 = vld [vmem:[#allocation7 + $0x160] sm:$0xff]
        %v543 = vld [vmem:[#allocation7 + $0x168] sm:$0xff]
        %v544 = vld [vmem:[#allocation7 + $0x170] sm:$0xff]
        %v545 = vld [vmem:[#allocation7 + $0x178] sm:$0xff]
        %v546 = vld [vmem:[%s4] sm:$0x1]
        %v547 = vld [vmem:[#allocation8] sm:$0xff]
        %548 = vmatprep.subr.mxu0 %v544
        %549 = vmatpush1.msra.mxu0 %v543
        %550 = vmatprep.subr.mxu0 %v541
        %551 = vmatpush1.msra.mxu0 %v540
        %552 = vmatprep.subr.mxu0 %v538
        %553 = vmatpush1.msra.mxu0 %v537
        %554 = vmatprep.subr.mxu0 %v535
        %555 = vmatpush1.msra.mxu0 %v534
        %556 = vmatprep.subr.mxu0 %v532
        %557 = vmatpush1.msra.mxu0 %v531
        %558 = vmatprep.subr.mxu0 %v529
        %559 = vmatpush1.msra.mxu0 %v528
        %560 = vmatprep.subr.mxu0 %v526
        %561 = vmatpush1.msra.mxu0 %v525
        %562 = vmatprep.subr.mxu0 %v523
        %563 = vmatpush1.msra.mxu0 %v522
        %564 = vmatprep.subr.mxu0 %v520
        %565 = vmatpush1.msra.mxu0 %v519
        %566 = vmatprep.subr.mxu0 %v517
        %567 = vmatpush1.msra.mxu0 %v516
        %568 = vmatprep.subr.mxu0 %v514
        %569 = vmatpush1.msra.mxu0 %v513
        %570 = vmatprep.subr.mxu0 %v511
        %571 = vmatpush1.msra.mxu0 %v510
        %572 = vmatprep.subr.mxu0 %v508
        %573 = vmatpush1.msra.mxu0 %v507
        %574 = vmatprep.subr.mxu0 %v505
        %575 = vmatpush1.msra.mxu0 %v504
        %576 = vmatprep.subr.mxu0 %v502
        %577 = vmatpush1.msra.mxu0 %v501
        %578 = vmatprep.subr.mxu0 %v499
        %579 = vmatpush1.msra.mxu0 %v498
        %580 = vmatprep.subr.mxu0 0.0
        %581 = vmatpush2.msra.mxu0 0.0
        %582 = vmatprep.subr.mxu0 0.0
        %583 = vmatpush2.msra.mxu0 0.0
        %584 = vmatprep.subr.mxu0 0.0
        %585 = vmatpush2.msra.mxu0 0.0
        %586 = vmatprep.subr.mxu0 0.0
        %587 = vmatpush2.msra.mxu0 0.0
        %588 = vmatprep.subr.mxu0 0.0
        %589 = vmatpush2.msra.mxu0 0.0
        %590 = vmatprep.subr.mxu0 0.0
        %591 = vmatpush2.msra.mxu0 0.0
        %592 = vmatprep.subr.mxu0 0.0
        %593 = vmatpush2.msra.mxu0 0.0
        %594 = vmatprep.subr.mxu0 0.0
        %595 = vmatpush2.msra.mxu0 0.0
        %596 = vmatprep.subr.mxu0 0.0
        %597 = vmatpush2.msra.mxu0 0.0
        %598 = vmatprep.subr.mxu0 0.0
        %599 = vmatpush2.msra.mxu0 0.0
        %600 = vmatprep.subr.mxu0 0.0
        %601 = vmatpush2.msra.mxu0 0.0
        %602 = vmatprep.subr.mxu0 0.0
        %603 = vmatpush2.msra.mxu0 0.0
        %604 = vmatprep.subr.mxu0 0.0
        %605 = vmatpush2.msra.mxu0 0.0
        %606 = vmatprep.subr.mxu0 0.0
        %607 = vmatpush2.msra.mxu0 0.0
        %608 = vmatprep.subr.mxu0 0.0
        %609 = vmatpush2.msra.mxu0 0.0
        %610 = vmatprep.subr.mxu0 0.0
        %611 = vmatpush2.msra.mxu0 0.0
        %612 = vmatprep.mubr.f32.mxu0 0.0
        %613 = vmatmul.mubr.f32.gmra.mxu0 %v547
        %v614 = vpop.f32.mrf.mxu0
        %v615 = vadd.f32 0.0, %v614
        %v616 = vpop.f32.mrf.mxu0
        %v617 = vadd.f32 0.0, %v616
        %618 = vdwg.mxu0
        %619 = vmatprep.subr.mxu0 0.0
        %620 = vmatpush1.msra.mxu0 %v545
        %621 = vmatprep.subr.mxu0 0.0
        %622 = vmatpush1.msra.mxu0 %v542
        %623 = vmatprep.subr.mxu0 0.0
        %624 = vmatpush1.msra.mxu0 %v539
        %625 = vmatprep.subr.mxu0 0.0
        %626 = vmatpush1.msra.mxu0 %v536
        %627 = vmatprep.subr.mxu0 0.0
        %628 = vmatpush1.msra.mxu0 %v533
        %629 = vmatprep.subr.mxu0 0.0
        %630 = vmatpush1.msra.mxu0 %v530
        %631 = vmatprep.subr.mxu0 0.0
        %632 = vmatpush1.msra.mxu0 %v527
        %633 = vmatprep.subr.mxu0 0.0
        %634 = vmatpush1.msra.mxu0 %v524
        %635 = vmatprep.subr.mxu0 0.0
        %636 = vmatpush1.msra.mxu0 %v521
        %637 = vmatprep.subr.mxu0 0.0
        %638 = vmatpush1.msra.mxu0 %v518
        %639 = vmatprep.subr.mxu0 0.0
        %640 = vmatpush1.msra.mxu0 %v515
        %641 = vmatprep.subr.mxu0 0.0
        %642 = vmatpush1.msra.mxu0 %v512
        %643 = vmatprep.subr.mxu0 0.0
        %644 = vmatpush1.msra.mxu0 %v509
        %645 = vmatprep.subr.mxu0 0.0
        %646 = vmatpush1.msra.mxu0 %v506
        %647 = vmatprep.subr.mxu0 0.0
        %648 = vmatpush1.msra.mxu0 %v503
        %649 = vmatprep.subr.mxu0 0.0
        %650 = vmatpush1.msra.mxu0 %v500
        %651 = vmatprep.subr.mxu0 0.0
        %652 = vmatpush2.msra.mxu0 0.0
        %653 = vmatprep.subr.mxu0 0.0
        %654 = vmatpush2.msra.mxu0 0.0
        %655 = vmatprep.subr.mxu0 0.0
        %656 = vmatpush2.msra.mxu0 0.0
        %657 = vmatprep.subr.mxu0 0.0
        %658 = vmatpush2.msra.mxu0 0.0
        %659 = vmatprep.subr.mxu0 0.0
        %660 = vmatpush2.msra.mxu0 0.0
        %661 = vmatprep.subr.mxu0 0.0
        %662 = vmatpush2.msra.mxu0 0.0
        %663 = vmatprep.subr.mxu0 0.0
        %664 = vmatpush2.msra.mxu0 0.0
        %665 = vmatprep.subr.mxu0 0.0
        %666 = vmatpush2.msra.mxu0 0.0
        %667 = vmatprep.subr.mxu0 0.0
        %668 = vmatpush2.msra.mxu0 0.0
        %669 = vmatprep.subr.mxu0 0.0
        %670 = vmatpush2.msra.mxu0 0.0
        %671 = vmatprep.subr.mxu0 0.0
        %672 = vmatpush2.msra.mxu0 0.0
        %673 = vmatprep.subr.mxu0 0.0
        %674 = vmatpush2.msra.mxu0 0.0
        %675 = vmatprep.subr.mxu0 0.0
        %676 = vmatpush2.msra.mxu0 0.0
        %677 = vmatprep.subr.mxu0 0.0
        %678 = vmatpush2.msra.mxu0 0.0
        %679 = vmatprep.subr.mxu0 0.0
        %680 = vmatpush2.msra.mxu0 0.0
        %681 = vmatprep.subr.mxu0 0.0
        %682 = vmatpush2.msra.mxu0 0.0
        %683 = vmatprep.mubr.f32.mxu0 0.0
        %684 = vmatmul.mubr.f32.gmra.mxu0 %v547
        %v685 = vpop.f32.mrf.mxu0
        %v686 = vadd.f32 0.0, %v685
        %v687 = vpop.f32.mrf.mxu0
        %688 = vdwg.mxu0
        %v689 = vadd.f32 %v391, %v615
        %v690 = vxor.u32 %v689, 2147483648
        %v691 = vmul.f32 %v690, 1.442695
        %v692 = vpow.pop %v691
        %v693 = vadd.f32 %v692, 1.0
        %v694 = vrcp.pop %v693
        %v695 = vmul.f32 1.0, %v694
        %v696 = vadd.f32 %v393, %v617
        %v697 = vxor.u32 %v696, 2147483648
        %v698 = vmul.f32 %v697, 1.442695
        %v699 = vpow.pop %v698
        %v700 = vadd.f32 %v699, 1.0
        %v701 = vrcp.pop %v700
        %v702 = vmul.f32 1.0, %v701
        %v704 = vlaneseq
        %v705 = vshrl.u32 %v704, 7
        %v706 = vsub.s32 0, %v705
        %v707 = vrot.slane %v546, %v706
        %v709 = vadd.f32 %v686, %v707
        %v710 = vmul.f32 %v695, %v709
        %v711 = vadd.f32 %v480, %v710
        %v712 = vtanh.pop %v711
        %v713 = vsub.f32 1.0, %v702
        %v714 = vmul.f32 %v713, %v712
        %v715 = vmul.f32 %v702, %v547
        %v716 = vadd.f32 %v714, %v715
        %717 = vmatprep.subr.mxu0 %v544
        %718 = vmatpush1.msra.mxu0 %v543
        %719 = vmatprep.subr.mxu0 %v541
        %720 = vmatpush1.msra.mxu0 %v540
        %721 = vmatprep.subr.mxu0 %v538
        %722 = vmatpush1.msra.mxu0 %v537
        %723 = vmatprep.subr.mxu0 %v535
        %724 = vmatpush1.msra.mxu0 %v534
        %725 = vmatprep.subr.mxu0 %v532
        %726 = vmatpush1.msra.mxu0 %v531
        %727 = vmatprep.subr.mxu0 %v529
        %728 = vmatpush1.msra.mxu0 %v528
        %729 = vmatprep.subr.mxu0 %v526
        %730 = vmatpush1.msra.mxu0 %v525
        %731 = vmatprep.subr.mxu0 %v523
        %732 = vmatpush1.msra.mxu0 %v522
        %733 = vmatprep.subr.mxu0 %v520
        %734 = vmatpush1.msra.mxu0 %v519
        %735 = vmatprep.subr.mxu0 %v517
        %736 = vmatpush1.msra.mxu0 %v516
        %737 = vmatprep.subr.mxu0 %v514
        %738 = vmatpush1.msra.mxu0 %v513
        %739 = vmatprep.subr.mxu0 %v511
        %740 = vmatpush1.msra.mxu0 %v510
        %741 = vmatprep.subr.mxu0 %v508
        %742 = vmatpush1.msra.mxu0 %v507
        %743 = vmatprep.subr.mxu0 %v505
        %744 = vmatpush1.msra.mxu0 %v504
        %745 = vmatprep.subr.mxu0 %v502
        %746 = vmatpush1.msra.mxu0 %v501
        %747 = vmatprep.subr.mxu0 %v499
        %748 = vmatpush1.msra.mxu0 %v498
        %749 = vmatprep.subr.mxu0 0.0
        %750 = vmatpush2.msra.mxu0 0.0
        %751 = vmatprep.subr.mxu0 0.0
        %752 = vmatpush2.msra.mxu0 0.0
        %753 = vmatprep.subr.mxu0 0.0
        %754 = vmatpush2.msra.mxu0 0.0
        %755 = vmatprep.subr.mxu0 0.0
        %756 = vmatpush2.msra.mxu0 0.0
        %757 = vmatprep.subr.mxu0 0.0
        %758 = vmatpush2.msra.mxu0 0.0
        %759 = vmatprep.subr.mxu0 0.0
        %760 = vmatpush2.msra.mxu0 0.0
        %761 = vmatprep.subr.mxu0 0.0
        %762 = vmatpush2.msra.mxu0 0.0
        %763 = vmatprep.subr.mxu0 0.0
        %764 = vmatpush2.msra.mxu0 0.0
        %765 = vmatprep.subr.mxu0 0.0
        %766 = vmatpush2.msra.mxu0 0.0
        %767 = vmatprep.subr.mxu0 0.0
        %768 = vmatpush2.msra.mxu0 0.0
        %769 = vmatprep.subr.mxu0 0.0
        %770 = vmatpush2.msra.mxu0 0.0
        %771 = vmatprep.subr.mxu0 0.0
        %772 = vmatpush2.msra.mxu0 0.0
        %773 = vmatprep.subr.mxu0 0.0
        %774 = vmatpush2.msra.mxu0 0.0
        %775 = vmatprep.subr.mxu0 0.0
        %776 = vmatpush2.msra.mxu0 0.0
        %777 = vmatprep.subr.mxu0 0.0
        %778 = vmatpush2.msra.mxu0 0.0
        %779 = vmatprep.subr.mxu0 0.0
        %780 = vmatpush2.msra.mxu0 0.0
        %781 = vmatprep.mubr.f32.mxu0 0.0
        %782 = vmatmul.mubr.f32.gmra.mxu0 %v716
        %v783 = vpop.f32.mrf.mxu0
        %v784 = vadd.f32 0.0, %v783
        %v785 = vpop.f32.mrf.mxu0
        %v786 = vadd.f32 0.0, %v785
        %787 = vdwg.mxu0
        %788 = vmatprep.subr.mxu0 0.0
        %789 = vmatpush1.msra.mxu0 %v545
        %790 = vmatprep.subr.mxu0 0.0
        %791 = vmatpush1.msra.mxu0 %v542
        %792 = vmatprep.subr.mxu0 0.0
        %793 = vmatpush1.msra.mxu0 %v539
        %794 = vmatprep.subr.mxu0 0.0
        %795 = vmatpush1.msra.mxu0 %v536
        %796 = vmatprep.subr.mxu0 0.0
        %797 = vmatpush1.msra.mxu0 %v533
        %798 = vmatprep.subr.mxu0 0.0
        %799 = vmatpush1.msra.mxu0 %v530
        %800 = vmatprep.subr.mxu0 0.0
        %801 = vmatpush1.msra.mxu0 %v527
        %802 = vmatprep.subr.mxu0 0.0
        %803 = vmatpush1.msra.mxu0 %v524
        %804 = vmatprep.subr.mxu0 0.0
        %805 = vmatpush1.msra.mxu0 %v521
        %806 = vmatprep.subr.mxu0 0.0
        %807 = vmatpush1.msra.mxu0 %v518
        %808 = vmatprep.subr.mxu0 0.0
        %809 = vmatpush1.msra.mxu0 %v515
        %810 = vmatprep.subr.mxu0 0.0
        %811 = vmatpush1.msra.mxu0 %v512
        %812 = vmatprep.subr.mxu0 0.0
        %813 = vmatpush1.msra.mxu0 %v509
        %814 = vmatprep.subr.mxu0 0.0
        %815 = vmatpush1.msra.mxu0 %v506
        %816 = vmatprep.subr.mxu0 0.0
        %817 = vmatpush1.msra.mxu0 %v503
        %818 = vmatprep.subr.mxu0 0.0
        %819 = vmatpush1.msra.mxu0 %v500
        %820 = vmatprep.subr.mxu0 0.0
        %821 = vmatpush2.msra.mxu0 0.0
        %822 = vmatprep.subr.mxu0 0.0
        %823 = vmatpush2.msra.mxu0 0.0
        %824 = vmatprep.subr.mxu0 0.0
        %825 = vmatpush2.msra.mxu0 0.0
        %826 = vmatprep.subr.mxu0 0.0
        %827 = vmatpush2.msra.mxu0 0.0
        %828 = vmatprep.subr.mxu0 0.0
        %829 = vmatpush2.msra.mxu0 0.0
        %830 = vmatprep.subr.mxu0 0.0
        %831 = vmatpush2.msra.mxu0 0.0
        %832 = vmatprep.subr.mxu0 0.0
        %833 = vmatpush2.msra.mxu0 0.0
        %834 = vmatprep.subr.mxu0 0.0
        %835 = vmatpush2.msra.mxu0 0.0
        %836 = vmatprep.subr.mxu0 0.0
        %837 = vmatpush2.msra.mxu0 0.0
        %838 = vmatprep.subr.mxu0 0.0
        %839 = vmatpush2.msra.mxu0 0.0
        %840 = vmatprep.subr.mxu0 0.0
        %841 = vmatpush2.msra.mxu0 0.0
        %842 = vmatprep.subr.mxu0 0.0
        %843 = vmatpush2.msra.mxu0 0.0
        %844 = vmatprep.subr.mxu0 0.0
        %845 = vmatpush2.msra.mxu0 0.0
        %846 = vmatprep.subr.mxu0 0.0
        %847 = vmatpush2.msra.mxu0 0.0
        %848 = vmatprep.subr.mxu0 0.0
        %849 = vmatpush2.msra.mxu0 0.0
        %850 = vmatprep.subr.mxu0 0.0
        %851 = vmatpush2.msra.mxu0 0.0
        %852 = vmatprep.mubr.f32.mxu0 0.0
        %853 = vmatmul.mubr.f32.gmra.mxu0 %v716
        %v854 = vpop.f32.mrf.mxu0
        %v855 = vadd.f32 0.0, %v854
        %v856 = vpop.f32.mrf.mxu0
        %857 = vdwg.mxu0
        %v858 = vadd.f32 %v397, %v784
        %v859 = vxor.u32 %v858, 2147483648
        %v860 = vmul.f32 %v859, 1.442695
        %v861 = vpow.pop %v860
        %v862 = vadd.f32 %v861, 1.0
        %v863 = vrcp.pop %v862
        %v864 = vmul.f32 1.0, %v863
        %v865 = vadd.f32 %v399, %v786
        %v866 = vxor.u32 %v865, 2147483648
        %v867 = vmul.f32 %v866, 1.442695
        %v868 = vpow.pop %v867
        %v869 = vadd.f32 %v868, 1.0
        %v870 = vrcp.pop %v869
        %v871 = vmul.f32 1.0, %v870
        %v872 = vadd.f32 %v855, %v707
        %v873 = vmul.f32 %v864, %v872
        %v874 = vadd.f32 %v485, %v873
        %v875 = vtanh.pop %v874
        %v876 = vsub.f32 1.0, %v871
        %v877 = vmul.f32 %v876, %v875
        %v878 = vmul.f32 %v871, %v716
        %v879 = vadd.f32 %v877, %v878
        %880 = vmatprep.subr.mxu0 %v544
        %881 = vmatpush1.msra.mxu0 %v543
        %882 = vmatprep.subr.mxu0 %v541
        %883 = vmatpush1.msra.mxu0 %v540
        %884 = vmatprep.subr.mxu0 %v538
        %885 = vmatpush1.msra.mxu0 %v537
        %886 = vmatprep.subr.mxu0 %v535
        %887 = vmatpush1.msra.mxu0 %v534
        %888 = vmatprep.subr.mxu0 %v532
        %889 = vmatpush1.msra.mxu0 %v531
        %890 = vmatprep.subr.mxu0 %v529
        %891 = vmatpush1.msra.mxu0 %v528
        %892 = vmatprep.subr.mxu0 %v526
        %893 = vmatpush1.msra.mxu0 %v525
        %894 = vmatprep.subr.mxu0 %v523
        %895 = vmatpush1.msra.mxu0 %v522
        %896 = vmatprep.subr.mxu0 %v520
        %897 = vmatpush1.msra.mxu0 %v519
        %898 = vmatprep.subr.mxu0 %v517
        %899 = vmatpush1.msra.mxu0 %v516
        %900 = vmatprep.subr.mxu0 %v514
        %901 = vmatpush1.msra.mxu0 %v513
        %902 = vmatprep.subr.mxu0 %v511
        %903 = vmatpush1.msra.mxu0 %v510
        %904 = vmatprep.subr.mxu0 %v508
        %905 = vmatpush1.msra.mxu0 %v507
        %906 = vmatprep.subr.mxu0 %v505
        %907 = vmatpush1.msra.mxu0 %v504
        %908 = vmatprep.subr.mxu0 %v502
        %909 = vmatpush1.msra.mxu0 %v501
        %910 = vmatprep.subr.mxu0 %v499
        %911 = vmatpush1.msra.mxu0 %v498
        %912 = vmatprep.subr.mxu0 0.0
        %913 = vmatpush2.msra.mxu0 0.0
        %914 = vmatprep.subr.mxu0 0.0
        %915 = vmatpush2.msra.mxu0 0.0
        %916 = vmatprep.subr.mxu0 0.0
        %917 = vmatpush2.msra.mxu0 0.0
        %918 = vmatprep.subr.mxu0 0.0
        %919 = vmatpush2.msra.mxu0 0.0
        %920 = vmatprep.subr.mxu0 0.0
        %921 = vmatpush2.msra.mxu0 0.0
        %922 = vmatprep.subr.mxu0 0.0
        %923 = vmatpush2.msra.mxu0 0.0
        %924 = vmatprep.subr.mxu0 0.0
        %925 = vmatpush2.msra.mxu0 0.0
        %926 = vmatprep.subr.mxu0 0.0
        %927 = vmatpush2.msra.mxu0 0.0
        %928 = vmatprep.subr.mxu0 0.0
        %929 = vmatpush2.msra.mxu0 0.0
        %930 = vmatprep.subr.mxu0 0.0
        %931 = vmatpush2.msra.mxu0 0.0
        %932 = vmatprep.subr.mxu0 0.0
        %933 = vmatpush2.msra.mxu0 0.0
        %934 = vmatprep.subr.mxu0 0.0
        %935 = vmatpush2.msra.mxu0 0.0
        %936 = vmatprep.subr.mxu0 0.0
        %937 = vmatpush2.msra.mxu0 0.0
        %938 = vmatprep.subr.mxu0 0.0
        %939 = vmatpush2.msra.mxu0 0.0
        %940 = vmatprep.subr.mxu0 0.0
        %941 = vmatpush2.msra.mxu0 0.0
        %942 = vmatprep.subr.mxu0 0.0
        %943 = vmatpush2.msra.mxu0 0.0
        %944 = vmatprep.mubr.f32.mxu0 0.0
        %945 = vmatmul.mubr.f32.gmra.mxu0 %v879
        %v946 = vpop.f32.mrf.mxu0
        %v947 = vadd.f32 0.0, %v946
        %v948 = vpop.f32.mrf.mxu0
        %v949 = vadd.f32 0.0, %v948
        %950 = vdwg.mxu0
        %951 = vmatprep.subr.mxu0 0.0
        %952 = vmatpush1.msra.mxu0 %v545
        %953 = vmatprep.subr.mxu0 0.0
        %954 = vmatpush1.msra.mxu0 %v542
        %955 = vmatprep.subr.mxu0 0.0
        %956 = vmatpush1.msra.mxu0 %v539
        %957 = vmatprep.subr.mxu0 0.0
        %958 = vmatpush1.msra.mxu0 %v536
        %959 = vmatprep.subr.mxu0 0.0
        %960 = vmatpush1.msra.mxu0 %v533
        %961 = vmatprep.subr.mxu0 0.0
        %962 = vmatpush1.msra.mxu0 %v530
        %963 = vmatprep.subr.mxu0 0.0
        %964 = vmatpush1.msra.mxu0 %v527
        %965 = vmatprep.subr.mxu0 0.0
        %966 = vmatpush1.msra.mxu0 %v524
        %967 = vmatprep.subr.mxu0 0.0
        %968 = vmatpush1.msra.mxu0 %v521
        %969 = vmatprep.subr.mxu0 0.0
        %970 = vmatpush1.msra.mxu0 %v518
        %971 = vmatprep.subr.mxu0 0.0
        %972 = vmatpush1.msra.mxu0 %v515
        %973 = vmatprep.subr.mxu0 0.0
        %974 = vmatpush1.msra.mxu0 %v512
        %975 = vmatprep.subr.mxu0 0.0
        %976 = vmatpush1.msra.mxu0 %v509
        %977 = vmatprep.subr.mxu0 0.0
        %978 = vmatpush1.msra.mxu0 %v506
        %979 = vmatprep.subr.mxu0 0.0
        %980 = vmatpush1.msra.mxu0 %v503
        %981 = vmatprep.subr.mxu0 0.0
        %982 = vmatpush1.msra.mxu0 %v500
        %983 = vmatprep.subr.mxu0 0.0
        %984 = vmatpush2.msra.mxu0 0.0
        %985 = vmatprep.subr.mxu0 0.0
        %986 = vmatpush2.msra.mxu0 0.0
        %987 = vmatprep.subr.mxu0 0.0
        %988 = vmatpush2.msra.mxu0 0.0
        %989 = vmatprep.subr.mxu0 0.0
        %990 = vmatpush2.msra.mxu0 0.0
        %991 = vmatprep.subr.mxu0 0.0
        %992 = vmatpush2.msra.mxu0 0.0
        %993 = vmatprep.subr.mxu0 0.0
        %994 = vmatpush2.msra.mxu0 0.0
        %995 = vmatprep.subr.mxu0 0.0
        %996 = vmatpush2.msra.mxu0 0.0
        %997 = vmatprep.subr.mxu0 0.0
        %998 = vmatpush2.msra.mxu0 0.0
        %999 = vmatprep.subr.mxu0 0.0
        %1000 = vmatpush2.msra.mxu0 0.0
        %1001 = vmatprep.subr.mxu0 0.0
        %1002 = vmatpush2.msra.mxu0 0.0
        %1003 = vmatprep.subr.mxu0 0.0
        %1004 = vmatpush2.msra.mxu0 0.0
        %1005 = vmatprep.subr.mxu0 0.0
        %1006 = vmatpush2.msra.mxu0 0.0
        %1007 = vmatprep.subr.mxu0 0.0
        %1008 = vmatpush2.msra.mxu0 0.0
        %1009 = vmatprep.subr.mxu0 0.0
        %1010 = vmatpush2.msra.mxu0 0.0
        %1011 = vmatprep.subr.mxu0 0.0
        %1012 = vmatpush2.msra.mxu0 0.0
        %1013 = vmatprep.subr.mxu0 0.0
        %1014 = vmatpush2.msra.mxu0 0.0
        %1015 = vmatprep.mubr.f32.mxu0 0.0
        %1016 = vmatmul.mubr.f32.gmra.mxu0 %v879
        %v1017 = vpop.f32.mrf.mxu0
        %v1018 = vadd.f32 0.0, %v1017
        %v1019 = vpop.f32.mrf.mxu0
        %1020 = vdwg.mxu0
        %v1021 = vadd.f32 %v403, %v947
        %v1022 = vxor.u32 %v1021, 2147483648
        %v1023 = vmul.f32 %v1022, 1.442695
        %v1024 = vpow.pop %v1023
        %v1025 = vadd.f32 %v1024, 1.0
        %v1026 = vrcp.pop %v1025
        %v1027 = vmul.f32 1.0, %v1026
        %v1028 = vadd.f32 %v405, %v949
        %v1029 = vxor.u32 %v1028, 2147483648
        %v1030 = vmul.f32 %v1029, 1.442695
        %v1031 = vpow.pop %v1030
        %v1032 = vadd.f32 %v1031, 1.0
        %v1033 = vrcp.pop %v1032
        %v1034 = vmul.f32 1.0, %v1033
        %v1035 = vadd.f32 %v1018, %v707
        %v1036 = vmul.f32 %v1027, %v1035
        %v1037 = vadd.f32 %v490, %v1036
        %v1038 = vtanh.pop %v1037
        %v1039 = vsub.f32 1.0, %v1034
        %v1040 = vmul.f32 %v1039, %v1038
        %v1041 = vmul.f32 %v1034, %v879
        %v1042 = vadd.f32 %v1040, %v1041
        %1043 = vmatprep.subr.mxu0 %v544
        %1044 = vmatpush1.msra.mxu0 %v543
        %1045 = vmatprep.subr.mxu0 %v541
        %1046 = vmatpush1.msra.mxu0 %v540
        %1047 = vmatprep.subr.mxu0 %v538
        %1048 = vmatpush1.msra.mxu0 %v537
        %1049 = vmatprep.subr.mxu0 %v535
        %1050 = vmatpush1.msra.mxu0 %v534
        %1051 = vmatprep.subr.mxu0 %v532
        %1052 = vmatpush1.msra.mxu0 %v531
        %1053 = vmatprep.subr.mxu0 %v529
        %1054 = vmatpush1.msra.mxu0 %v528
        %1055 = vmatprep.subr.mxu0 %v526
        %1056 = vmatpush1.msra.mxu0 %v525
        %1057 = vmatprep.subr.mxu0 %v523
        %1058 = vmatpush1.msra.mxu0 %v522
        %1059 = vmatprep.subr.mxu0 %v520
        %1060 = vmatpush1.msra.mxu0 %v519
        %1061 = vmatprep.subr.mxu0 %v517
        %1062 = vmatpush1.msra.mxu0 %v516
        %1063 = vmatprep.subr.mxu0 %v514
        %1064 = vmatpush1.msra.mxu0 %v513
        %1065 = vmatprep.subr.mxu0 %v511
        %1066 = vmatpush1.msra.mxu0 %v510
        %1067 = vmatprep.subr.mxu0 %v508
        %1068 = vmatpush1.msra.mxu0 %v507
        %1069 = vmatprep.subr.mxu0 %v505
        %1070 = vmatpush1.msra.mxu0 %v504
        %1071 = vmatprep.subr.mxu0 %v502
        %1072 = vmatpush1.msra.mxu0 %v501
        %1073 = vmatprep.subr.mxu0 %v499
        %1074 = vmatpush1.msra.mxu0 %v498
        %1075 = vmatprep.subr.mxu0 0.0
        %1076 = vmatpush2.msra.mxu0 0.0
        %1077 = vmatprep.subr.mxu0 0.0
        %1078 = vmatpush2.msra.mxu0 0.0
        %1079 = vmatprep.subr.mxu0 0.0
        %1080 = vmatpush2.msra.mxu0 0.0
        %1081 = vmatprep.subr.mxu0 0.0
        %1082 = vmatpush2.msra.mxu0 0.0
        %1083 = vmatprep.subr.mxu0 0.0
        %1084 = vmatpush2.msra.mxu0 0.0
        %1085 = vmatprep.subr.mxu0 0.0
        %1086 = vmatpush2.msra.mxu0 0.0
        %1087 = vmatprep.subr.mxu0 0.0
        %1088 = vmatpush2.msra.mxu0 0.0
        %1089 = vmatprep.subr.mxu0 0.0
        %1090 = vmatpush2.msra.mxu0 0.0
        %1091 = vmatprep.subr.mxu0 0.0
        %1092 = vmatpush2.msra.mxu0 0.0
        %1093 = vmatprep.subr.mxu0 0.0
        %1094 = vmatpush2.msra.mxu0 0.0
        %1095 = vmatprep.subr.mxu0 0.0
        %1096 = vmatpush2.msra.mxu0 0.0
        %1097 = vmatprep.subr.mxu0 0.0
        %1098 = vmatpush2.msra.mxu0 0.0
        %1099 = vmatprep.subr.mxu0 0.0
        %1100 = vmatpush2.msra.mxu0 0.0
        %1101 = vmatprep.subr.mxu0 0.0
        %1102 = vmatpush2.msra.mxu0 0.0
        %1103 = vmatprep.subr.mxu0 0.0
        %1104 = vmatpush2.msra.mxu0 0.0
        %1105 = vmatprep.subr.mxu0 0.0
        %1106 = vmatpush2.msra.mxu0 0.0
        %1107 = vmatprep.mubr.f32.mxu0 0.0
        %1108 = vmatmul.mubr.f32.gmra.mxu0 %v1042
        %v1109 = vpop.f32.mrf.mxu0
        %v1110 = vadd.f32 0.0, %v1109
        %v1111 = vpop.f32.mrf.mxu0
        %v1112 = vadd.f32 0.0, %v1111
        %1113 = vdwg.mxu0
        %1114 = vmatprep.subr.mxu0 0.0
        %1115 = vmatpush1.msra.mxu0 %v545
        %1116 = vmatprep.subr.mxu0 0.0
        %1117 = vmatpush1.msra.mxu0 %v542
        %1118 = vmatprep.subr.mxu0 0.0
        %1119 = vmatpush1.msra.mxu0 %v539
        %1120 = vmatprep.subr.mxu0 0.0
        %1121 = vmatpush1.msra.mxu0 %v536
        %1122 = vmatprep.subr.mxu0 0.0
        %1123 = vmatpush1.msra.mxu0 %v533
        %1124 = vmatprep.subr.mxu0 0.0
        %1125 = vmatpush1.msra.mxu0 %v530
        %1126 = vmatprep.subr.mxu0 0.0
        %1127 = vmatpush1.msra.mxu0 %v527
        %1128 = vmatprep.subr.mxu0 0.0
        %1129 = vmatpush1.msra.mxu0 %v524
        %1130 = vmatprep.subr.mxu0 0.0
        %1131 = vmatpush1.msra.mxu0 %v521
        %1132 = vmatprep.subr.mxu0 0.0
        %1133 = vmatpush1.msra.mxu0 %v518
        %1134 = vmatprep.subr.mxu0 0.0
        %1135 = vmatpush1.msra.mxu0 %v515
        %1136 = vmatprep.subr.mxu0 0.0
        %1137 = vmatpush1.msra.mxu0 %v512
        %1138 = vmatprep.subr.mxu0 0.0
        %1139 = vmatpush1.msra.mxu0 %v509
        %1140 = vmatprep.subr.mxu0 0.0
        %1141 = vmatpush1.msra.mxu0 %v506
        %1142 = vmatprep.subr.mxu0 0.0
        %1143 = vmatpush1.msra.mxu0 %v503
        %1144 = vmatprep.subr.mxu0 0.0
        %1145 = vmatpush1.msra.mxu0 %v500
        %1146 = vmatprep.subr.mxu0 0.0
        %1147 = vmatpush2.msra.mxu0 0.0
        %1148 = vmatprep.subr.mxu0 0.0
        %1149 = vmatpush2.msra.mxu0 0.0
        %1150 = vmatprep.subr.mxu0 0.0
        %1151 = vmatpush2.msra.mxu0 0.0
        %1152 = vmatprep.subr.mxu0 0.0
        %1153 = vmatpush2.msra.mxu0 0.0
        %1154 = vmatprep.subr.mxu0 0.0
        %1155 = vmatpush2.msra.mxu0 0.0
        %1156 = vmatprep.subr.mxu0 0.0
        %1157 = vmatpush2.msra.mxu0 0.0
        %1158 = vmatprep.subr.mxu0 0.0
        %1159 = vmatpush2.msra.mxu0 0.0
        %1160 = vmatprep.subr.mxu0 0.0
        %1161 = vmatpush2.msra.mxu0 0.0
        %1162 = vmatprep.subr.mxu0 0.0
        %1163 = vmatpush2.msra.mxu0 0.0
        %1164 = vmatprep.subr.mxu0 0.0
        %1165 = vmatpush2.msra.mxu0 0.0
        %1166 = vmatprep.subr.mxu0 0.0
        %1167 = vmatpush2.msra.mxu0 0.0
        %1168 = vmatprep.subr.mxu0 0.0
        %1169 = vmatpush2.msra.mxu0 0.0
        %1170 = vmatprep.subr.mxu0 0.0
        %1171 = vmatpush2.msra.mxu0 0.0
        %1172 = vmatprep.subr.mxu0 0.0
        %1173 = vmatpush2.msra.mxu0 0.0
        %1174 = vmatprep.subr.mxu0 0.0
        %1175 = vmatpush2.msra.mxu0 0.0
        %1176 = vmatprep.subr.mxu0 0.0
        %1177 = vmatpush2.msra.mxu0 0.0
        %1178 = vmatprep.mubr.f32.mxu0 0.0
        %1179 = vmatmul.mubr.f32.gmra.mxu0 %v1042
        %v1180 = vpop.f32.mrf.mxu0
        %v1181 = vadd.f32 0.0, %v1180
        %v1182 = vpop.f32.mrf.mxu0
        %1183 = vdwg.mxu0
        %v1184 = vadd.f32 %v409, %v1110
        %v1185 = vxor.u32 %v1184, 2147483648
        %v1186 = vmul.f32 %v1185, 1.442695
        %v1187 = vpow.pop %v1186
        %v1188 = vadd.f32 %v1187, 1.0
        %v1189 = vrcp.pop %v1188
        %v1190 = vmul.f32 1.0, %v1189
        %v1191 = vadd.f32 %v411, %v1112
        %v1192 = vxor.u32 %v1191, 2147483648
        %v1193 = vmul.f32 %v1192, 1.442695
        %v1194 = vpow.pop %v1193
        %v1195 = vadd.f32 %v1194, 1.0
        %v1196 = vrcp.pop %v1195
        %v1197 = vmul.f32 1.0, %v1196
        %v1198 = vadd.f32 %v1181, %v707
        %v1199 = vmul.f32 %v1190, %v1198
        %v1200 = vadd.f32 %v495, %v1199
        %v1201 = vtanh.pop %v1200
        %v1202 = vsub.f32 1.0, %v1197
        %v1203 = vmul.f32 %v1202, %v1201
        %v1204 = vmul.f32 %v1197, %v1042
        %v1205 = vadd.f32 %v1203, %v1204
        %1206 = vst [vmem:[#allocation8] sm:$0xff] %v1205
        // Predicated region
        $region57: #{tpu_custom_call.1} parent=39 // pred_check
          %p1207 = pneg %p144
        $region58: #{tpu_custom_call.1} parent=39 // pred_check_branch
          %1209 = sbr.rel (%p1207) target = $region60
        $region59: #{tpu_custom_call.1} parent=39 // pred_region
          %s1211 = ssub.s32 128, 128
          %1212 = vsyncadd [#allocation4], %s1211
          %s1214 = sshll.u32 [#allocation8], 4
          %s1215 = int_to_ptr.vmem [resolvable:$true] %s1214
          %1217 = dma.vmem_to_hbm [thread:$0]  %s1215, 128, %s5, [#allocation4]
        $region60: #{tpu_custom_call.1} parent=39 // pred_fallthru
          _
        // Predicated region
        $region61: #{tpu_custom_call.1} parent=39 // pred_check
          %p1218 = pneg %p144
        $region62: #{tpu_custom_call.1} parent=39 // pred_check_branch
          %1220 = sbr.rel (%p1218) target = $region64
        $region63: #{tpu_custom_call.1} parent=39 // pred_region
          %1221 = dma.done [#allocation4], 128
        $region64: #{tpu_custom_call.1} parent=39 // pred_fallthru
          _
      $region40: #{tpu_custom_call.1} parent=5 // pred_fallthru
        _
      %p1222 = scmp.le.s32.totalorder 2, %s16
      // Predicated region
      $region65: #{tpu_custom_call.1} parent=5 // pred_check
        %p1223 = pneg %p1222
      $region66: #{tpu_custom_call.1} parent=5 // pred_check_branch
        %1225 = sbr.rel (%p1223) target = $region68
      $region67: #{tpu_custom_call.1} parent=5 // pred_region
        %s1226 = ssub.s32 %s16, 2
      $region68: #{tpu_custom_call.1} parent=5 // pred_fallthru
        _
    $region6: #{tpu_custom_call.1} parent=1 // loop_footer
      %s20 = sadd.s32 1, %s16
    $region7: #{tpu_custom_call.1} parent=1 // loop_footer_branch
      %15 = sbr.rel target = $region3
    $region8: #{tpu_custom_call.1} parent=1 // loop_exit
      _
    %1227 = vsyncpa [#allocation3], 1
    %s1228 = scalar_lea.sflag [#allocation3], 1
    %1229 = vsyncpa %s1228, 1
    %1230 = vsyncpa [#allocation6], 1
    %1231 = vsyncpa [#allocation4], 1
    %s1232 = scalar_lea.sflag [#allocation4], 1
    %1233 = vsyncpa %s1232, 1

</llo_original>
